<compile_context>
chip_gen: v7x
topology: tpu7x:2x2x1
jax: 0.10.0
libtpu: 0.0.40
codegen_flags: <defaults>
</compile_context>

<pallas_src>
import jax
import jax.numpy as jnp
from jax.experimental import pallas as pl
from jax.experimental.pallas import tpu as pltpu

MAX_LENGTH = 15


def attn_decoder_seq_kernel(
    # inputs
    emb_ref, enc_ref, mask_ref, h0_ref, c0_ref,
    wa_ref, ua_ref, bau_ref, v_ref,
    wg_ref, bg_ref, wout_ref, bout_ref,
    # outputs
    step_ref, hout_ref, cout_ref,
    # scratch
    ua_sc, h_sc, c_sc, x_sc,
):
    t = pl.program_id(0)
    B, L, _ = enc_ref.shape
    H = h0_ref.shape[1]
    V = wout_ref.shape[1]

    @pl.when(t == 0)
    def _init():
        h_sc[...] = h0_ref[...]
        c_sc[...] = c0_ref[...]
        # Loop-invariant Ua(encoder_outputs) + (b_u + b_a): computed once per decode.
        for b in range(B):  # B is small & static -> unrolled, avoids an in-kernel reshape
            ua_sc[b] = (
                jnp.dot(enc_ref[b], ua_ref[...], preferred_element_type=jnp.float32)
                + bau_ref[...]
            )

    emb = emb_ref[...]        # (B, H)
    h_prev = h_sc[...]        # (B, H)
    c_prev = c_sc[...]        # (B, H)
    enc = enc_ref[...]        # (B, L, 2H)
    mask = mask_ref[...]      # (B, L) int32

    # --- additive attention ---------------------------------------------------
    wa_part = jnp.dot(h_prev, wa_ref[...], preferred_element_type=jnp.float32)   # (B, H)
    tt = jnp.tanh(wa_part[:, None, :] + ua_sc[...])                              # (B, L, H)
    v2 = v_ref[...]                                                              # (1, H), kept 2-D
    scores = jnp.sum(tt * v2[None, :, :], axis=-1)                               # (B, L)
    scores = jnp.where(mask == 0, jnp.float32(-1e9), scores)                     # masked_fill_

    m = jnp.max(scores, axis=1, keepdims=True)
    e = jnp.exp(scores - m)
    # exact reciprocal (approx=True would be EUP-free but loosens parity with the reference)
    attn_w = e * pl.reciprocal(jnp.sum(e, axis=1, keepdims=True))                # (B, L)

    context = jnp.sum(attn_w[:, :, None] * enc, axis=1)                          # (B, 2H)

    # --- LSTMCell: single fused gate matmul (PyTorch gate order i, f, g, o) ----
    x_sc[:, 0:H] = emb
    x_sc[:, H:3 * H] = context
    x_sc[:, 3 * H:4 * H] = h_prev
    gates = (
        jnp.dot(x_sc[...], wg_ref[...], preferred_element_type=jnp.float32)
        + bg_ref[...]
    )                                                                            # (B, 4H)

    sig = jax.nn.sigmoid(gates)   # one EUP pass over the full (B, 4H) row
    th = jnp.tanh(gates)          # one EUP pass
    i_g = sig[:, 0 * H:1 * H]
    f_g = sig[:, 1 * H:2 * H]
    g_g = th[:, 2 * H:3 * H]
    o_g = sig[:, 3 * H:4 * H]

    c_new = f_g * c_prev + i_g * g_g
    h_new = o_g * jnp.tanh(c_new)

    # --- output projection + log_softmax --------------------------------------
    logits = (
        jnp.dot(h_new, wout_ref[...], preferred_element_type=jnp.float32)
        + bout_ref[...]
    )
    lm = jnp.max(logits, axis=1, keepdims=True)
    shifted = logits - lm
    log_p = shifted - jnp.log(jnp.sum(jnp.exp(shifted), axis=1, keepdims=True))

    # carry + packed per-step writeback (one output block / one DMA per step)
    h_sc[...] = h_new
    c_sc[...] = c_new
    step_ref[:, 0:V] = log_p
    step_ref[:, V:V + L] = attn_w

    @pl.when(t == pl.num_programs(0) - 1)
    def _final():
        hout_ref[...] = h_new
        cout_ref[...] = c_new


def attn_decoder_decode(emb_seq, h0, c0, encoder_outputs, mask, params):
    """Run T decoder steps (given per-step embeddings) in a single fused pallas_call.

    Returns (log_softmax_seq (T,B,V), (h_T, c_T), attn_weights_seq (T,B,L)).
    """
    T, B, H = emb_seq.shape
    L = encoder_outputs.shape[1]
    V = params["w_out"].shape[1]
    P = V + L

    def const(shape):  # loop-invariant: DMA'd once, VMEM-resident for the whole decode
        return pl.BlockSpec(shape, lambda t, _n=len(shape): (0,) * _n)

    in_specs = [
        pl.BlockSpec((None, B, H), lambda t: (t, 0, 0)),   # embedded token at step t
        const((B, L, 2 * H)),                              # encoder_outputs
        const((B, L)),                                     # mask
        const((B, H)), const((B, H)),                      # h0, c0
        const((H, H)),                                     # w_a
        const((2 * H, H)),                                 # u_a
        const((1, H)),                                     # b_a + b_u
        const((1, H)),                                     # v_a
        const((4 * H, 4 * H)),                             # fused [W_ih ; W_hh]^T
        const((1, 4 * H)),                                 # b_ih + b_hh
        const((H, V)),                                     # w_out
        const((1, V)),                                     # b_out
    ]
    out_specs = (
        pl.BlockSpec((None, B, P), lambda t: (t, 0, 0)),   # packed [log_softmax | attn_w]
        pl.BlockSpec((B, H), lambda t: (0, 0)),            # h_T (resident, written at last step)
        pl.BlockSpec((B, H), lambda t: (0, 0)),            # c_T
    )
    out_shape = (
        jax.ShapeDtypeStruct((T, B, P), jnp.float32),
        jax.ShapeDtypeStruct((B, H), jnp.float32),
        jax.ShapeDtypeStruct((B, H), jnp.float32),
    )
    scratch_shapes = [
        pltpu.VMEM((B, L, H), jnp.float32),    # Ua(enc) + biases (loop-invariant)
        pltpu.VMEM((B, H), jnp.float32),       # h carry
        pltpu.VMEM((B, H), jnp.float32),       # c carry
        pltpu.VMEM((B, 4 * H), jnp.float32),   # fused LSTM input row [emb | ctx | h]
    ]

    packed, h_T, c_T = pl.pallas_call(
        attn_decoder_seq_kernel,
        out_shape=out_shape,
        grid_spec=pltpu.PrefetchScalarGridSpec(
            num_scalar_prefetch=0,
            grid=(T,),
            in_specs=in_specs,
            out_specs=out_specs,
            scratch_shapes=scratch_shapes,
        ),
        compiler_params=pltpu.CompilerParams(
            dimension_semantics=("arbitrary",),   # sequential: h/c carried across steps
        ),
    )(
        emb_seq, encoder_outputs, mask, h0, c0,
        params["w_a"], params["u_a"], params["b_au"], params["v_a"],
        params["w_gates"], params["b_gates"], params["w_out"], params["b_out"],
    )
    return packed[:, :, :V], (h_T, c_T), packed[:, :, V:]


def attn_decoder_step(input_ids, hidden, encoder_outputs, mask, params):
    """Equivalent of AttnDecoderRNN.forward (eval mode) for one decoder step."""
    embedded = params["embedding"][input_ids]       # (B, H) embedding lookup (JAX glue)
    # TODO(synk): dropout omitted (identity in eval mode).
    logp_seq, (h, c), attn_seq = attn_decoder_decode(
        embedded[None], hidden[0], hidden[1], encoder_outputs, mask, params)
    return logp_seq[0], (h, c), attn_seq[0]


def init_params(key, hidden_size, output_size):
    H, V = hidden_size, output_size
    ks = jax.random.split(key, 12)
    u = lambda k, shape: jax.random.uniform(k, shape, jnp.float32, -0.1, 0.1)

    embedding = u(ks[0], (V, H))

    # attn_Wa: Linear(H, H); attn_Ua: Linear(2H, H); attn_v: Linear(H, 1, bias=False)
    w_a = u(ks[1], (H, H))          # stored (in, out): kernel does x @ W
    b_a = u(ks[2], (1, H))
    u_a = u(ks[3], (2 * H, H))
    b_u = u(ks[4], (1, H))
    v_a = u(ks[5], (1, H))

    # LSTMCell(3H, H), PyTorch layout: W_ih (4H, 3H) over [emb | context], W_hh (4H, H)
    w_ih = u(ks[6], (4 * H, 3 * H))
    w_hh = u(ks[7], (4 * H, H))
    b_ih = u(ks[8], (1, 4 * H))
    b_hh = u(ks[9], (1, 4 * H))

    # out: Linear(H, V)
    w_out = u(ks[10], (H, V))
    b_out = u(ks[11], (1, V))

    return {
        "embedding": embedding,
        "w_a": w_a, "u_a": u_a, "v_a": v_a,
        "b_au": b_a + b_u,                                      # both land inside tanh(...)
        "w_gates": jnp.concatenate([w_ih.T, w_hh.T], axis=0),   # (4H, 4H), rows = [emb|ctx|h]
        "b_gates": b_ih + b_hh,                                 # (1, 4H)
        "w_out": w_out, "b_out": b_out,
    }


def reference_step(emb, h_prev, c_prev, enc, mask, p):
    """Pure-JAX mirror of the PyTorch forward (eval mode), using the fused params."""
    H = h_prev.shape[1]
    wa_part = h_prev @ p["w_a"]
    ua_part = jnp.einsum("bld,dh->blh", enc, p["u_a"]) + p["b_au"]
    scores = jnp.sum(jnp.tanh(wa_part[:, None, :] + ua_part)
                     * p["v_a"][0][None, None, :], axis=-1)
    scores = jnp.where(mask == 0, -1e9, scores)
    attn_w = jax.nn.softmax(scores, axis=1)
    ctx = jnp.einsum("bl,bld->bd", attn_w, enc)
    x = jnp.concatenate([emb, ctx, h_prev], axis=-1)
    gates = x @ p["w_gates"] + p["b_gates"]
    i_g = jax.nn.sigmoid(gates[:, :H])
    f_g = jax.nn.sigmoid(gates[:, H:2 * H])
    g_g = jnp.tanh(gates[:, 2 * H:3 * H])
    o_g = jax.nn.sigmoid(gates[:, 3 * H:])
    c_new = f_g * c_prev + i_g * g_g
    h_new = o_g * jnp.tanh(c_new)
    logits = h_new @ p["w_out"] + p["b_out"]
    return jax.nn.log_softmax(logits, axis=1), h_new, c_new, attn_w


def reference_decode(emb_seq, h0, c0, enc, mask, p):
    h, c = h0, c0
    logs, attns = [], []
    for t in range(emb_seq.shape[0]):
        log_p, h, c, attn_w = reference_step(emb_seq[t], h, c, enc, mask, p)
        logs.append(log_p)
        attns.append(attn_w)
    return jnp.stack(logs), (h, c), jnp.stack(attns)


if __name__ == "__main__":
    B, H, V, L, T = 2, 32, 24, MAX_LENGTH, MAX_LENGTH

    key = jax.random.PRNGKey(0)
    k_param, k_tok, k_enc = jax.random.split(key, 3)

    params = init_params(k_param, H, V)

    # teacher-forced decoder token sequence + encoder state
    token_seq = jax.random.randint(k_tok, (T, B), 0, V, dtype=jnp.int32)
    encoder_outputs = jax.random.normal(k_enc, (B, L, 2 * H), jnp.float32)
    lengths = jnp.array([L, L - 5], jnp.int32)
    mask = (jnp.arange(L)[None, :] < lengths[:, None]).astype(jnp.int32)
    h0 = jnp.zeros((B, H), jnp.float32)
    c0 = jnp.zeros((B, H), jnp.float32)

    # embedding lookup for all steps (JAX glue; dropout is identity in eval mode)
    emb_seq = params["embedding"][token_seq]        # (T, B, H)

    # fused T-step decode: one pallas_call, weights stay VMEM-resident across steps
    logp_seq, (h_T, c_T), attn_seq = attn_decoder_decode(
        emb_seq, h0, c0, encoder_outputs, mask, params)
    jax.block_until_ready((logp_seq, h_T, c_T, attn_seq))

    # single-step interface (== AttnDecoderRNN.forward) on step 0
    log_p0, (h1, c1), attn0 = attn_decoder_step(
        token_seq[0], (h0, c0), encoder_outputs, mask, params)
    jax.block_until_ready((log_p0, h1, c1, attn0))

    # pure-JAX reference
    r_logp, (r_h, r_c), r_attn = reference_decode(
        emb_seq, h0, c0, encoder_outputs, mask, params)

    assert jnp.allclose(logp_seq, r_logp, atol=2e-4), "log_softmax mismatch"
    assert jnp.allclose(attn_seq, r_attn, atol=2e-4), "attn mismatch"
    assert jnp.allclose(h_T, r_h, atol=2e-4), "h mismatch"
    assert jnp.allclose(c_T, r_c, atol=2e-4), "c mismatch"
    assert jnp.allclose(log_p0, r_logp[0], atol=2e-4), "single-step log_softmax mismatch"
    assert jnp.allclose(attn0, r_attn[0], atol=2e-4), "single-step attn mismatch"

    print("KERNEL_OK")
</pallas_src>

<mosaic_0001>
module attributes {stable_mosaic.version = 11 : i64} {
  func.func @attn_decoder_seq_kernel(%arg0: i32, %arg1: memref<1x2x32xf32, #tpu.memory_space<vmem>>, %arg2: memref<2x15x64xf32, #tpu.memory_space<vmem>>, %arg3: memref<2x15xi32, #tpu.memory_space<vmem>>, %arg4: memref<2x32xf32, #tpu.memory_space<vmem>>, %arg5: memref<2x32xf32, #tpu.memory_space<vmem>>, %arg6: memref<32x32xf32, #tpu.memory_space<vmem>>, %arg7: memref<64x32xf32, #tpu.memory_space<vmem>>, %arg8: memref<1x32xf32, #tpu.memory_space<vmem>>, %arg9: memref<1x32xf32, #tpu.memory_space<vmem>>, %arg10: memref<128x128xf32, #tpu.memory_space<vmem>>, %arg11: memref<1x128xf32, #tpu.memory_space<vmem>>, %arg12: memref<32x24xf32, #tpu.memory_space<vmem>>, %arg13: memref<1x24xf32, #tpu.memory_space<vmem>>, %arg14: memref<1x2x39xf32, #tpu.memory_space<vmem>>, %arg15: memref<2x32xf32, #tpu.memory_space<vmem>>, %arg16: memref<2x32xf32, #tpu.memory_space<vmem>>, %arg17: memref<2x15x32xf32, #tpu.memory_space<vmem>>, %arg18: memref<2x32xf32, #tpu.memory_space<vmem>>, %arg19: memref<2x32xf32, #tpu.memory_space<vmem>>, %arg20: memref<2x128xf32, #tpu.memory_space<vmem>>) attributes {dimension_semantics = [#tpu.dimension_semantics<arbitrary>], iteration_bounds = array<i64: 15>, scalar_prefetch = 0 : i64, scratch_operands = 4 : i64, tpu.core_type = #tpu.core_type<tc>, window_params = [{transform_indices = @transform_0, window_bounds = array<i64: 1, 2, 32>}, {pipeline_mode = #tpu.pipeline_mode<synchronous>, transform_indices = @transform_1, window_bounds = array<i64: 2, 15, 64>}, {pipeline_mode = #tpu.pipeline_mode<synchronous>, transform_indices = @transform_2, window_bounds = array<i64: 2, 15>}, {pipeline_mode = #tpu.pipeline_mode<synchronous>, transform_indices = @transform_3, window_bounds = array<i64: 2, 32>}, {pipeline_mode = #tpu.pipeline_mode<synchronous>, transform_indices = @transform_4, window_bounds = array<i64: 2, 32>}, {pipeline_mode = #tpu.pipeline_mode<synchronous>, transform_indices = @transform_5, window_bounds = array<i64: 32, 32>}, {pipeline_mode = #tpu.pipeline_mode<synchronous>, transform_indices = @transform_6, window_bounds = array<i64: 64, 32>}, {pipeline_mode = #tpu.pipeline_mode<synchronous>, transform_indices = @transform_7, window_bounds = array<i64: 1, 32>}, {pipeline_mode = #tpu.pipeline_mode<synchronous>, transform_indices = @transform_8, window_bounds = array<i64: 1, 32>}, {pipeline_mode = #tpu.pipeline_mode<synchronous>, transform_indices = @transform_9, window_bounds = array<i64: 128, 128>}, {pipeline_mode = #tpu.pipeline_mode<synchronous>, transform_indices = @transform_10, window_bounds = array<i64: 1, 128>}, {pipeline_mode = #tpu.pipeline_mode<synchronous>, transform_indices = @transform_11, window_bounds = array<i64: 32, 24>}, {pipeline_mode = #tpu.pipeline_mode<synchronous>, transform_indices = @transform_12, window_bounds = array<i64: 1, 24>}, {transform_indices = @transform_13, window_bounds = array<i64: 1, 2, 39>}, {pipeline_mode = #tpu.pipeline_mode<synchronous>, transform_indices = @transform_14, window_bounds = array<i64: 2, 32>}, {pipeline_mode = #tpu.pipeline_mode<synchronous>, transform_indices = @transform_15, window_bounds = array<i64: 2, 32>}]} {
    %c0_i32 = arith.constant 0 : i32
    %0 = arith.cmpi eq, %arg0, %c0_i32 : i32
    %1 = arith.extui %0 : i1 to i32
    %c0_i32_0 = arith.constant 0 : i32
    %2 = arith.cmpi ne, %1, %c0_i32_0 : i32
    scf.if %2 {
      %c0_54 = arith.constant 0 : index
      %c0_55 = arith.constant 0 : index
      %89 = vector.load %arg4[%c0_54, %c0_55] : memref<2x32xf32, #tpu.memory_space<vmem>>, vector<2x32xf32>
      %c0_56 = arith.constant 0 : index
      %c0_57 = arith.constant 0 : index
      %90 = vector.load %arg18[%c0_56, %c0_57] : memref<2x32xf32, #tpu.memory_space<vmem>>, vector<2x32xf32>
      tpu.vector_store %arg18[%c0_56, %c0_57], %89 {strides = array<i32>} : memref<2x32xf32, #tpu.memory_space<vmem>>, vector<2x32xf32>,
      %c0_58 = arith.constant 0 : index
      %c0_59 = arith.constant 0 : index
      %91 = vector.load %arg5[%c0_58, %c0_59] : memref<2x32xf32, #tpu.memory_space<vmem>>, vector<2x32xf32>
      %c0_60 = arith.constant 0 : index
      %c0_61 = arith.constant 0 : index
      %92 = vector.load %arg19[%c0_60, %c0_61] : memref<2x32xf32, #tpu.memory_space<vmem>>, vector<2x32xf32>
      tpu.vector_store %arg19[%c0_60, %c0_61], %91 {strides = array<i32>} : memref<2x32xf32, #tpu.memory_space<vmem>>, vector<2x32xf32>,
      %c0_62 = arith.constant 0 : index
      %c0_63 = arith.constant 0 : index
      %c0_64 = arith.constant 0 : index
      %93 = vector.load %arg2[%c0_62, %c0_63, %c0_64] : memref<2x15x64xf32, #tpu.memory_space<vmem>>, vector<1x15x64xf32>
      %94 = vector.shape_cast %93 : vector<1x15x64xf32> to vector<15x64xf32>
      %c0_65 = arith.constant 0 : index
      %c0_66 = arith.constant 0 : index
      %95 = vector.load %arg7[%c0_65, %c0_66] : memref<64x32xf32, #tpu.memory_space<vmem>>, vector<64x32xf32>
      %cst_67 = arith.constant dense<0.000000e+00> : vector<15x32xf32>
      %96 = tpu.matmul %94, %95, %cst_67 {dimension_numbers = #tpu.dot_dimension_numbers<[1], [0], [0], [1], [0, 0, 1, 1], [], []>} : vector<15x64xf32>, vector<64x32xf32>, vector<15x32xf32> -> vector<15x32xf32>
      %c0_68 = arith.constant 0 : index
      %c0_69 = arith.constant 0 : index
      %97 = vector.load %arg8[%c0_68, %c0_69] : memref<1x32xf32, #tpu.memory_space<vmem>>, vector<1x32xf32>
      %98 = vector.broadcast %97 : vector<1x32xf32> to vector<15x32xf32>
      %99 = arith.addf %96, %98 : vector<15x32xf32>
      %c0_70 = arith.constant 0 : index
      %c0_71 = arith.constant 0 : index
      %c0_72 = arith.constant 0 : index
      %100 = vector.load %arg17[%c0_70, %c0_71, %c0_72] : memref<2x15x32xf32, #tpu.memory_space<vmem>>, vector<1x15x32xf32>
      %101 = vector.shape_cast %100 : vector<1x15x32xf32> to vector<15x32xf32>
      %102 = vector.shape_cast %99 : vector<15x32xf32> to vector<1x15x32xf32>
      tpu.vector_store %arg17[%c0_70, %c0_71, %c0_72], %102 {strides = array<i32>} : memref<2x15x32xf32, #tpu.memory_space<vmem>>, vector<1x15x32xf32>,
      %c1 = arith.constant 1 : index
      %c0_73 = arith.constant 0 : index
      %c0_74 = arith.constant 0 : index
      %103 = vector.load %arg2[%c1, %c0_73, %c0_74] : memref<2x15x64xf32, #tpu.memory_space<vmem>>, vector<1x15x64xf32>
      %104 = vector.shape_cast %103 : vector<1x15x64xf32> to vector<15x64xf32>
      %c0_75 = arith.constant 0 : index
      %c0_76 = arith.constant 0 : index
      %105 = vector.load %arg7[%c0_75, %c0_76] : memref<64x32xf32, #tpu.memory_space<vmem>>, vector<64x32xf32>
      %cst_77 = arith.constant dense<0.000000e+00> : vector<15x32xf32>
      %106 = tpu.matmul %104, %105, %cst_77 {dimension_numbers = #tpu.dot_dimension_numbers<[1], [0], [0], [1], [0, 0, 1, 1], [], []>} : vector<15x64xf32>, vector<64x32xf32>, vector<15x32xf32> -> vector<15x32xf32>
      %c0_78 = arith.constant 0 : index
      %c0_79 = arith.constant 0 : index
      %107 = vector.load %arg8[%c0_78, %c0_79] : memref<1x32xf32, #tpu.memory_space<vmem>>, vector<1x32xf32>
      %108 = vector.broadcast %107 : vector<1x32xf32> to vector<15x32xf32>
      %109 = arith.addf %106, %108 : vector<15x32xf32>
      %c1_80 = arith.constant 1 : index
      %c0_81 = arith.constant 0 : index
      %c0_82 = arith.constant 0 : index
      %110 = vector.load %arg17[%c1_80, %c0_81, %c0_82] : memref<2x15x32xf32, #tpu.memory_space<vmem>>, vector<1x15x32xf32>
      %111 = vector.shape_cast %110 : vector<1x15x32xf32> to vector<15x32xf32>
      %112 = vector.shape_cast %109 : vector<15x32xf32> to vector<1x15x32xf32>
      tpu.vector_store %arg17[%c1_80, %c0_81, %c0_82], %112 {strides = array<i32>} : memref<2x15x32xf32, #tpu.memory_space<vmem>>, vector<1x15x32xf32>,
    } else {
    }
    %c0 = arith.constant 0 : index
    %c0_1 = arith.constant 0 : index
    %c0_2 = arith.constant 0 : index
    %3 = vector.load %arg1[%c0, %c0_1, %c0_2] : memref<1x2x32xf32, #tpu.memory_space<vmem>>, vector<1x2x32xf32>
    %4 = vector.shape_cast %3 : vector<1x2x32xf32> to vector<2x32xf32>
    %c0_3 = arith.constant 0 : index
    %c0_4 = arith.constant 0 : index
    %5 = vector.load %arg18[%c0_3, %c0_4] : memref<2x32xf32, #tpu.memory_space<vmem>>, vector<2x32xf32>
    %c0_5 = arith.constant 0 : index
    %c0_6 = arith.constant 0 : index
    %6 = vector.load %arg19[%c0_5, %c0_6] : memref<2x32xf32, #tpu.memory_space<vmem>>, vector<2x32xf32>
    %c0_7 = arith.constant 0 : index
    %c0_8 = arith.constant 0 : index
    %c0_9 = arith.constant 0 : index
    %7 = vector.load %arg2[%c0_7, %c0_8, %c0_9] : memref<2x15x64xf32, #tpu.memory_space<vmem>>, vector<2x15x64xf32>
    %c0_10 = arith.constant 0 : index
    %c0_11 = arith.constant 0 : index
    %8 = vector.load %arg3[%c0_10, %c0_11] : memref<2x15xi32, #tpu.memory_space<vmem>>, vector<2x15xi32>
    %c0_12 = arith.constant 0 : index
    %c0_13 = arith.constant 0 : index
    %9 = vector.load %arg6[%c0_12, %c0_13] : memref<32x32xf32, #tpu.memory_space<vmem>>, vector<32x32xf32>
    %cst = arith.constant dense<0.000000e+00> : vector<2x32xf32>
    %10 = tpu.matmul %5, %9, %cst {dimension_numbers = #tpu.dot_dimension_numbers<[1], [0], [0], [1], [0, 0, 1, 1], [], []>} : vector<2x32xf32>, vector<32x32xf32>, vector<2x32xf32> -> vector<2x32xf32>
    %11 = vector.shape_cast %10 : vector<2x32xf32> to vector<2x1x32xf32>
    %c0_14 = arith.constant 0 : index
    %c0_15 = arith.constant 0 : index
    %c0_16 = arith.constant 0 : index
    %12 = vector.load %arg17[%c0_14, %c0_15, %c0_16] : memref<2x15x32xf32, #tpu.memory_space<vmem>>, vector<2x15x32xf32>
    %13 = vector.broadcast %11 : vector<2x1x32xf32> to vector<2x15x32xf32>
    %14 = arith.addf %13, %12 : vector<2x15x32xf32>
    %15 = math.tanh %14 : vector<2x15x32xf32>
    %c0_17 = arith.constant 0 : index
    %c0_18 = arith.constant 0 : index
    %16 = vector.load %arg9[%c0_17, %c0_18] : memref<1x32xf32, #tpu.memory_space<vmem>>, vector<1x32xf32>
    %17 = vector.shape_cast %16 : vector<1x32xf32> to vector<1x1x32xf32>
    %18 = vector.broadcast %17 : vector<1x1x32xf32> to vector<2x15x32xf32>
    %19 = arith.mulf %15, %18 : vector<2x15x32xf32>
    %cst_19 = arith.constant dense<0.000000e+00> : vector<2x15xf32>
    %20 = vector.multi_reduction <add>, %19, %cst_19 [2] : vector<2x15x32xf32> to vector<2x15xf32>
    %c0_i32_20 = arith.constant 0 : i32
    %21 = vector.broadcast %c0_i32_20 : i32 to vector<2x15xi32>
    %22 = arith.cmpi eq, %8, %21 : vector<2x15xi32>
    %cst_21 = arith.constant -1.000000e+09 : f32
    %23 = vector.broadcast %cst_21 : f32 to vector<2x15xf32>
    %24 = arith.select %22, %23, %20 : vector<2x15xi1>, vector<2x15xf32>
    %cst_22 = arith.constant dense<0xFF800000> : vector<2xf32>
    %25 = vector.multi_reduction <maximumf>, %24, %cst_22 [1] : vector<2x15xf32> to vector<2xf32>
    %26 = vector.shape_cast %25 : vector<2xf32> to vector<2x1xf32>
    %27 = vector.broadcast %26 : vector<2x1xf32> to vector<2x15xf32>
    %28 = arith.subf %24, %27 : vector<2x15xf32>
    %29 = math.exp %28 : vector<2x15xf32>
    %cst_23 = arith.constant dense<0.000000e+00> : vector<2xf32>
    %30 = vector.multi_reduction <add>, %29, %cst_23 [1] : vector<2x15xf32> to vector<2xf32>
    %31 = vector.shape_cast %30 : vector<2xf32> to vector<2x1xf32>
    %32 = tpu.reciprocal %31 : vector<2x1xf32> -> vector<2x1xf32>
    %33 = vector.broadcast %32 : vector<2x1xf32> to vector<2x15xf32>
    %34 = arith.mulf %29, %33 : vector<2x15xf32>
    %35 = vector.shape_cast %34 : vector<2x15xf32> to vector<2x15x1xf32>
    %36 = vector.broadcast %35 : vector<2x15x1xf32> to vector<2x15x64xf32>
    %37 = arith.mulf %36, %7 : vector<2x15x64xf32>
    %cst_24 = arith.constant dense<0.000000e+00> : vector<2x64xf32>
    %38 = vector.multi_reduction <add>, %37, %cst_24 [1] : vector<2x15x64xf32> to vector<2x64xf32>
    %c0_25 = arith.constant 0 : index
    %c0_26 = arith.constant 0 : index
    %39 = vector.load %arg20[%c0_25, %c0_26] : memref<2x128xf32, #tpu.memory_space<vmem>>, vector<2x32xf32>
    tpu.vector_store %arg20[%c0_25, %c0_26], %4 {strides = array<i32>} : memref<2x128xf32, #tpu.memory_space<vmem>>, vector<2x32xf32>,
    %c0_27 = arith.constant 0 : index
    %c32 = arith.constant 32 : index
    %40 = vector.load %arg20[%c0_27, %c32] : memref<2x128xf32, #tpu.memory_space<vmem>>, vector<2x64xf32>
    tpu.vector_store %arg20[%c0_27, %c32], %38 {strides = array<i32>} : memref<2x128xf32, #tpu.memory_space<vmem>>, vector<2x64xf32>,
    %c0_28 = arith.constant 0 : index
    %c96 = arith.constant 96 : index
    %41 = vector.load %arg20[%c0_28, %c96] : memref<2x128xf32, #tpu.memory_space<vmem>>, vector<2x32xf32>
    tpu.vector_store %arg20[%c0_28, %c96], %5 {strides = array<i32>} : memref<2x128xf32, #tpu.memory_space<vmem>>, vector<2x32xf32>,
    %c0_29 = arith.constant 0 : index
    %c0_30 = arith.constant 0 : index
    %42 = vector.load %arg20[%c0_29, %c0_30] : memref<2x128xf32, #tpu.memory_space<vmem>>, vector<2x128xf32>
    %c0_31 = arith.constant 0 : index
    %c0_32 = arith.constant 0 : index
    %43 = vector.load %arg10[%c0_31, %c0_32] : memref<128x128xf32, #tpu.memory_space<vmem>>, vector<128x128xf32>
    %cst_33 = arith.constant dense<0.000000e+00> : vector<2x128xf32>
    %44 = tpu.matmul %42, %43, %cst_33 {dimension_numbers = #tpu.dot_dimension_numbers<[1], [0], [0], [1], [0, 0, 1, 1], [], []>} : vector<2x128xf32>, vector<128x128xf32>, vector<2x128xf32> -> vector<2x128xf32>
    %c0_34 = arith.constant 0 : index
    %c0_35 = arith.constant 0 : index
    %45 = vector.load %arg11[%c0_34, %c0_35] : memref<1x128xf32, #tpu.memory_space<vmem>>, vector<1x128xf32>
    %46 = vector.broadcast %45 : vector<1x128xf32> to vector<2x128xf32>
    %47 = arith.addf %44, %46 : vector<2x128xf32>
    %48 = arith.negf %47 : vector<2x128xf32>
    %49 = math.exp %48 : vector<2x128xf32>
    %cst_36 = arith.constant 1.000000e+00 : f32
    %50 = vector.broadcast %cst_36 : f32 to vector<2x128xf32>
    %51 = arith.addf %50, %49 : vector<2x128xf32>
    %52 = arith.divf %50, %51 : vector<2x128xf32>
    %53 = math.tanh %47 : vector<2x128xf32>
    %54 = vector.extract_strided_slice %52 {offsets = [0, 0], sizes = [2, 32], strides = [1, 1]} : vector<2x128xf32> to vector<2x32xf32>
    %55 = vector.extract_strided_slice %52 {offsets = [0, 32], sizes = [2, 32], strides = [1, 1]} : vector<2x128xf32> to vector<2x32xf32>
    %56 = vector.extract_strided_slice %53 {offsets = [0, 64], sizes = [2, 32], strides = [1, 1]} : vector<2x128xf32> to vector<2x32xf32>
    %57 = vector.extract_strided_slice %52 {offsets = [0, 96], sizes = [2, 32], strides = [1, 1]} : vector<2x128xf32> to vector<2x32xf32>
    %58 = arith.mulf %55, %6 : vector<2x32xf32>
    %59 = arith.mulf %54, %56 : vector<2x32xf32>
    %60 = arith.addf %58, %59 : vector<2x32xf32>
    %61 = math.tanh %60 : vector<2x32xf32>
    %62 = arith.mulf %57, %61 : vector<2x32xf32>
    %c0_37 = arith.constant 0 : index
    %c0_38 = arith.constant 0 : index
    %63 = vector.load %arg12[%c0_37, %c0_38] : memref<32x24xf32, #tpu.memory_space<vmem>>, vector<32x24xf32>
    %cst_39 = arith.constant dense<0.000000e+00> : vector<2x24xf32>
    %64 = tpu.matmul %62, %63, %cst_39 {dimension_numbers = #tpu.dot_dimension_numbers<[1], [0], [0], [1], [0, 0, 1, 1], [], []>} : vector<2x32xf32>, vector<32x24xf32>, vector<2x24xf32> -> vector<2x24xf32>
    %c0_40 = arith.constant 0 : index
    %c0_41 = arith.constant 0 : index
    %65 = vector.load %arg13[%c0_40, %c0_41] : memref<1x24xf32, #tpu.memory_space<vmem>>, vector<1x24xf32>
    %66 = vector.broadcast %65 : vector<1x24xf32> to vector<2x24xf32>
    %67 = arith.addf %64, %66 : vector<2x24xf32>
    %cst_42 = arith.constant dense<0xFF800000> : vector<2xf32>
    %68 = vector.multi_reduction <maximumf>, %67, %cst_42 [1] : vector<2x24xf32> to vector<2xf32>
    %69 = vector.shape_cast %68 : vector<2xf32> to vector<2x1xf32>
    %70 = vector.broadcast %69 : vector<2x1xf32> to vector<2x24xf32>
    %71 = arith.subf %67, %70 : vector<2x24xf32>
    %72 = math.exp %71 : vector<2x24xf32>
    %cst_43 = arith.constant dense<0.000000e+00> : vector<2xf32>
    %73 = vector.multi_reduction <add>, %72, %cst_43 [1] : vector<2x24xf32> to vector<2xf32>
    %74 = vector.shape_cast %73 : vector<2xf32> to vector<2x1xf32>
    %75 = math.log %74 : vector<2x1xf32>
    %76 = vector.broadcast %75 : vector<2x1xf32> to vector<2x24xf32>
    %77 = arith.subf %71, %76 : vector<2x24xf32>
    %c0_44 = arith.constant 0 : index
    %c0_45 = arith.constant 0 : index
    %78 = vector.load %arg18[%c0_44, %c0_45] : memref<2x32xf32, #tpu.memory_space<vmem>>, vector<2x32xf32>
    tpu.vector_store %arg18[%c0_44, %c0_45], %62 {strides = array<i32>} : memref<2x32xf32, #tpu.memory_space<vmem>>, vector<2x32xf32>,
    %c0_46 = arith.constant 0 : index
    %c0_47 = arith.constant 0 : index
    %79 = vector.load %arg19[%c0_46, %c0_47] : memref<2x32xf32, #tpu.memory_space<vmem>>, vector<2x32xf32>
    tpu.vector_store %arg19[%c0_46, %c0_47], %60 {strides = array<i32>} : memref<2x32xf32, #tpu.memory_space<vmem>>, vector<2x32xf32>,
    %c0_48 = arith.constant 0 : index
    %c0_49 = arith.constant 0 : index
    %c0_50 = arith.constant 0 : index
    %80 = vector.load %arg14[%c0_48, %c0_49, %c0_50] : memref<1x2x39xf32, #tpu.memory_space<vmem>>, vector<1x2x24xf32>
    %81 = vector.shape_cast %80 : vector<1x2x24xf32> to vector<2x24xf32>
    %82 = vector.shape_cast %77 : vector<2x24xf32> to vector<1x2x24xf32>
    tpu.vector_store %arg14[%c0_48, %c0_49, %c0_50], %82 {strides = array<i32>} : memref<1x2x39xf32, #tpu.memory_space<vmem>>, vector<1x2x24xf32>,
    %c0_51 = arith.constant 0 : index
    %c0_52 = arith.constant 0 : index
    %c24 = arith.constant 24 : index
    %83 = vector.load %arg14[%c0_51, %c0_52, %c24] : memref<1x2x39xf32, #tpu.memory_space<vmem>>, vector<1x2x15xf32>
    %84 = vector.shape_cast %83 : vector<1x2x15xf32> to vector<2x15xf32>
    %85 = vector.shape_cast %34 : vector<2x15xf32> to vector<1x2x15xf32>
    tpu.vector_store %arg14[%c0_51, %c0_52, %c24], %85 {strides = array<i32>} : memref<1x2x39xf32, #tpu.memory_space<vmem>>, vector<1x2x15xf32>,
    %c14_i32 = arith.constant 14 : i32
    %86 = arith.cmpi eq, %arg0, %c14_i32 : i32
    %87 = arith.extui %86 : i1 to i32
    %c0_i32_53 = arith.constant 0 : i32
    %88 = arith.cmpi ne, %87, %c0_i32_53 : i32
    scf.if %88 {
      %c0_54 = arith.constant 0 : index
      %c0_55 = arith.constant 0 : index
      %89 = vector.load %arg15[%c0_54, %c0_55] : memref<2x32xf32, #tpu.memory_space<vmem>>, vector<2x32xf32>
      tpu.vector_store %arg15[%c0_54, %c0_55], %62 {strides = array<i32>} : memref<2x32xf32, #tpu.memory_space<vmem>>, vector<2x32xf32>,
      %c0_56 = arith.constant 0 : index
      %c0_57 = arith.constant 0 : index
      %90 = vector.load %arg16[%c0_56, %c0_57] : memref<2x32xf32, #tpu.memory_space<vmem>>, vector<2x32xf32>
      tpu.vector_store %arg16[%c0_56, %c0_57], %60 {strides = array<i32>} : memref<2x32xf32, #tpu.memory_space<vmem>>, vector<2x32xf32>,
    } else {
    }
    return
  }
  func.func @transform_0(%arg0: i32) -> (i32, i32, i32) {
    %c0_i32 = arith.constant 0 : i32
    %c0_i32_0 = arith.constant 0 : i32
    %c0_i32_1 = arith.constant 0 : i32
    return %arg0, %c0_i32, %c0_i32_0 : i32, i32, i32
  }
  func.func @transform_1(%arg0: i32) -> (i32, i32, i32) {
    %c0_i32 = arith.constant 0 : i32
    %c0_i32_0 = arith.constant 0 : i32
    %c0_i32_1 = arith.constant 0 : i32
    %c0_i32_2 = arith.constant 0 : i32
    return %c0_i32, %c0_i32_0, %c0_i32_1 : i32, i32, i32
  }
  func.func @transform_2(%arg0: i32) -> (i32, i32) {
    %c0_i32 = arith.constant 0 : i32
    %c0_i32_0 = arith.constant 0 : i32
    %c0_i32_1 = arith.constant 0 : i32
    return %c0_i32, %c0_i32_0 : i32, i32
  }
  func.func @transform_3(%arg0: i32) -> (i32, i32) {
    %c0_i32 = arith.constant 0 : i32
    %c0_i32_0 = arith.constant 0 : i32
    %c0_i32_1 = arith.constant 0 : i32
    return %c0_i32, %c0_i32_0 : i32, i32
  }
  func.func @transform_4(%arg0: i32) -> (i32, i32) {
    %c0_i32 = arith.constant 0 : i32
    %c0_i32_0 = arith.constant 0 : i32
    %c0_i32_1 = arith.constant 0 : i32
    return %c0_i32, %c0_i32_0 : i32, i32
  }
  func.func @transform_5(%arg0: i32) -> (i32, i32) {
    %c0_i32 = arith.constant 0 : i32
    %c0_i32_0 = arith.constant 0 : i32
    %c0_i32_1 = arith.constant 0 : i32
    return %c0_i32, %c0_i32_0 : i32, i32
  }
  func.func @transform_6(%arg0: i32) -> (i32, i32) {
    %c0_i32 = arith.constant 0 : i32
    %c0_i32_0 = arith.constant 0 : i32
    %c0_i32_1 = arith.constant 0 : i32
    return %c0_i32, %c0_i32_0 : i32, i32
  }
  func.func @transform_7(%arg0: i32) -> (i32, i32) {
    %c0_i32 = arith.constant 0 : i32
    %c0_i32_0 = arith.constant 0 : i32
    %c0_i32_1 = arith.constant 0 : i32
    return %c0_i32, %c0_i32_0 : i32, i32
  }
  func.func @transform_8(%arg0: i32) -> (i32, i32) {
    %c0_i32 = arith.constant 0 : i32
    %c0_i32_0 = arith.constant 0 : i32
    %c0_i32_1 = arith.constant 0 : i32
    return %c0_i32, %c0_i32_0 : i32, i32
  }
  func.func @transform_9(%arg0: i32) -> (i32, i32) {
    %c0_i32 = arith.constant 0 : i32
    %c0_i32_0 = arith.constant 0 : i32
    %c0_i32_1 = arith.constant 0 : i32
    return %c0_i32, %c0_i32_0 : i32, i32
  }
  func.func @transform_10(%arg0: i32) -> (i32, i32) {
    %c0_i32 = arith.constant 0 : i32
    %c0_i32_0 = arith.constant 0 : i32
    %c0_i32_1 = arith.constant 0 : i32
    return %c0_i32, %c0_i32_0 : i32, i32
  }
  func.func @transform_11(%arg0: i32) -> (i32, i32) {
    %c0_i32 = arith.constant 0 : i32
    %c0_i32_0 = arith.constant 0 : i32
    %c0_i32_1 = arith.constant 0 : i32
    return %c0_i32, %c0_i32_0 : i32, i32
  }
  func.func @transform_12(%arg0: i32) -> (i32, i32) {
    %c0_i32 = arith.constant 0 : i32
    %c0_i32_0 = arith.constant 0 : i32
    %c0_i32_1 = arith.constant 0 : i32
    return %c0_i32, %c0_i32_0 : i32, i32
  }
  func.func @transform_13(%arg0: i32) -> (i32, i32, i32) {
    %c0_i32 = arith.constant 0 : i32
    %c0_i32_0 = arith.constant 0 : i32
    %c0_i32_1 = arith.constant 0 : i32
    return %arg0, %c0_i32, %c0_i32_0 : i32, i32, i32
  }
  func.func @transform_14(%arg0: i32) -> (i32, i32) {
    %c0_i32 = arith.constant 0 : i32
    %c0_i32_0 = arith.constant 0 : i32
    %c0_i32_1 = arith.constant 0 : i32
    return %c0_i32, %c0_i32_0 : i32, i32
  }
  func.func @transform_15(%arg0: i32) -> (i32, i32) {
    %c0_i32 = arith.constant 0 : i32
    %c0_i32_0 = arith.constant 0 : i32
    %c0_i32_1 = arith.constant 0 : i32
    return %c0_i32, %c0_i32_0 : i32, i32
  }
}

</mosaic_0001>

<llo_original>
// kernel: tpu_custom_call.1
$region0: #{tpu_custom_call.1}
  #allocation0 [shape = 'u32[]', space=smem, size = 0x4, offset = 0x4, fixed_abs, tag = 'smem constant byte address 0x4 - core index']
  #allocation1 [shape = 'u32[144,128]{1,0:T(1,128)}', space=vmem, size = 0x12000, scoped, tag = 'internal scratch']
  #allocation2 [shape = 'f32[2,15,32]{2,1,0:T(8,128)}', space=vmem, size = 0x4000, scoped, tag = 'scratch operand']
  #allocation3 [shape = 'f32[2,32]{1,0:T(2,128)}', space=vmem, size = 0x400, scoped, tag = 'scratch operand']
  #allocation4 [shape = 'f32[2,32]{1,0:T(2,128)}', space=vmem, size = 0x400, scoped, tag = 'scratch operand']
  #allocation5 [shape = 'f32[2,128]{1,0:T(2,128)}', space=vmem, size = 0x400, scoped, tag = 'scratch operand']
  %s0 = inlined_call_operand.vmem [shape: f32[15,2,32], index: 0, kind: input, shape index: {}]
  %s1 = inlined_call_operand.vmem [shape: f32[2,15,64], index: 1, kind: input, shape index: {}]
  %s2 = inlined_call_operand.vmem [shape: s32[2,15], index: 2, kind: input, shape index: {}]
  %s3 = inlined_call_operand.vmem [shape: f32[2,32], index: 3, kind: input, shape index: {}]
  %s4 = inlined_call_operand.vmem [shape: f32[2,32], index: 4, kind: input, shape index: {}]
  %s5 = inlined_call_operand.vmem [shape: f32[32,32], index: 5, kind: input, shape index: {}]
  %s6 = inlined_call_operand.vmem [shape: f32[64,32], index: 6, kind: input, shape index: {}]
  %s7 = inlined_call_operand.vmem [shape: f32[1,32], index: 7, kind: input, shape index: {}]
  %s8 = inlined_call_operand.vmem [shape: f32[1,32], index: 8, kind: input, shape index: {}]
  %s9 = inlined_call_operand.vmem [shape: f32[128,128], index: 9, kind: input, shape index: {}]
  %s10 = inlined_call_operand.vmem [shape: f32[1,128], index: 10, kind: input, shape index: {}]
  %s11 = inlined_call_operand.vmem [shape: f32[32,24], index: 11, kind: input, shape index: {}]
  %s12 = inlined_call_operand.vmem [shape: f32[1,24], index: 12, kind: input, shape index: {}]
  %s13 = inlined_call_operand.hbm [shape: f32[15,2,39], index: 13, kind: output, shape index: {0}]
  %s14 = inlined_call_operand.hbm [shape: f32[2,32], index: 14, kind: output, shape index: {1}]
  %s15 = inlined_call_operand.hbm [shape: f32[2,32], index: 15, kind: output, shape index: {2}]
  %16 = xla_tuple %s13, %s14, %s15
  %s17 = sld [smem:[#allocation0]]
  $region109: #{tpu_custom_call.1} parent=0
    _
  %s19 = ssub.s32 1, %s17
  %s20 = scalar_select 0, %s19, %s17
  $region1: #{tpu_custom_call.1} parent=0
    #allocation6 [shape = 'u8[2048]{0}', space=vmem, size = 0x800, scoped, tag = 'output window, operand 0']
    #allocation7 [shape = 's32[2]{0}', space=sflag, size = 0x8, scoped, tag = 'scoped memory for tpu_custom_call.1']
    #allocation8 [shape = 'u8[1024]{0}', space=vmem, size = 0x400, scoped, tag = 'output window, operand 1, single buffered']
    #allocation9 [shape = 's32[1]{0}', space=sflag, size = 0x4, scoped, tag = 'scoped memory for tpu_custom_call.1']
    #allocation10 [shape = 'u8[1024]{0}', space=vmem, size = 0x400, scoped, tag = 'output window, operand 2, single buffered']
    %21 = vsyncpa [#allocation7], 0
    %s22 = scalar_lea.sflag [#allocation7], 1
    %23 = vsyncpa %s22, 0
    %24 = vsyncpa [#allocation9], 0
    loop: start=0, step=1, limit=17
    $region2: #{tpu_custom_call.1} parent=1 // loop_pre_header
      _
    $region3: #{tpu_custom_call.1} parent=1 // loop_header
      %s26 = sphi 0, %s30
      %p27 = scmp.ge.s32.totalorder %s26, 17
      %s36 = sphi 0, %s38
      %s39 = sphi 0, %s36
      %s40 = sphi 0, %s39
      %s56 = sphi 0, %s40
      %s60 = sphi 0, %s60
      %s62 = sphi 0, %s60
      %s63 = sphi 0, %s62
      %s77 = sphi 0, %s63
      %s81 = sphi 0, %s81
      %s83 = sphi 0, %s81
      %s84 = sphi 0, %s83
      %s98 = sphi 0, %s84
      %s102 = sphi 0, %s102
      %s104 = sphi 0, %s102
      %s105 = sphi 0, %s104
      %s119 = sphi 0, %s105
      %s123 = sphi 0, %s123
      %s125 = sphi 0, %s123
      %s126 = sphi 0, %s125
      %s140 = sphi 0, %s126
      %s144 = sphi 0, %s144
      %s146 = sphi 0, %s144
      %s147 = sphi 0, %s146
      %s161 = sphi 0, %s147
      %s165 = sphi 0, %s165
      %s167 = sphi 0, %s165
      %s168 = sphi 0, %s167
      %s182 = sphi 0, %s168
      %s186 = sphi 0, %s186
      %s188 = sphi 0, %s186
      %s189 = sphi 0, %s188
      %s203 = sphi 0, %s189
      %s207 = sphi 0, %s207
      %s209 = sphi 0, %s207
      %s210 = sphi 0, %s209
      %s224 = sphi 0, %s210
      %s228 = sphi 0, %s228
      %s230 = sphi 0, %s228
      %s231 = sphi 0, %s230
      %s245 = sphi 0, %s231
      %s249 = sphi 0, %s249
      %s251 = sphi 0, %s249
      %s252 = sphi 0, %s251
      %s266 = sphi 0, %s252
      %s270 = sphi 0, %s270
      %s272 = sphi 0, %s270
      %s273 = sphi 0, %s272
      %s287 = sphi 0, %s273
      %s291 = sphi 0, %s291
      %s293 = sphi 0, %s291
      %s294 = sphi 0, %s293
      %s308 = sphi 0, %s294
      %s314 = sphi 0, %s316
      %s317 = sphi 0, %s314
      %s318 = sphi 0, %s317
      %s334 = sphi 0, %s318
      %s338 = sphi 0, %s338
      %s340 = sphi 0, %s338
      %s341 = sphi 0, %s340
      %s355 = sphi 0, %s341
      %s359 = sphi 0, %s359
      %s361 = sphi 0, %s359
      %s362 = sphi 0, %s361
      %s376 = sphi 0, %s362
    $region4: #{tpu_custom_call.1} parent=1 // loop_header_branch
      %29 = sbr.rel (%p27) target = $region8
    $region5: #{tpu_custom_call.1} parent=1 // loop_body
      %s31 = ssub.s32 %s26, 1
      %s32 = ssub.s32 %s26, 2
      %s33 = sadd.s32 %s26, 1
      %s34 = ssub.s32 %s26, %s33
      %p35 = scmp.eq.s32.totalorder %s34, 0
      %s37 = sadd.s32 %s36, 1
      %s38 = scalar_select %p35, %s36, %s37
      %p41 = pneg %p35
      %p42 = scmp.eq.s32.totalorder %s26, 14
      %p43 = por %p41, %p42
      %p44 = scmp.ne.s32.totalorder %s36, %s39
      %p45 = scmp.eq.s32.totalorder %s26, 0
      %p46 = por %p44, %p45
      %p47 = scmp.ne.s32.totalorder %s36, %s39
      %p48 = scmp.eq.s32.totalorder %s31, 14
      %p49 = por %p47, %p48
      %p50 = scmp.ne.s32.totalorder %s39, %s40
      %p51 = scmp.eq.s32.totalorder %s31, 0
      %p52 = por %p50, %p51
      %p53 = scmp.ne.s32.totalorder %s39, %s40
      %p54 = scmp.eq.s32.totalorder %s32, 14
      %p55 = por %p53, %p54
      %p57 = scmp.ne.s32.totalorder %s40, %s56
      %p58 = scmp.eq.s32.totalorder %s32, 0
      %p59 = por %p57, %p58
      %s61 = sadd.s32 %s60, 1
      %p64 = scmp.eq.s32.totalorder %s26, 14
      %p65 = scmp.ne.s32.totalorder %s60, %s62
      %p66 = scmp.eq.s32.totalorder %s26, 0
      %p67 = por %p65, %p66
      %p68 = scmp.ne.s32.totalorder %s60, %s62
      %p69 = scmp.eq.s32.totalorder %s31, 14
      %p70 = por %p68, %p69
      %p71 = scmp.ne.s32.totalorder %s62, %s63
      %p72 = scmp.eq.s32.totalorder %s31, 0
      %p73 = por %p71, %p72
      %p74 = scmp.ne.s32.totalorder %s62, %s63
      %p75 = scmp.eq.s32.totalorder %s32, 14
      %p76 = por %p74, %p75
      %p78 = scmp.ne.s32.totalorder %s63, %s77
      %p79 = scmp.eq.s32.totalorder %s32, 0
      %p80 = por %p78, %p79
      %s82 = sadd.s32 %s81, 1
      %p85 = scmp.eq.s32.totalorder %s26, 14
      %p86 = scmp.ne.s32.totalorder %s81, %s83
      %p87 = scmp.eq.s32.totalorder %s26, 0
      %p88 = por %p86, %p87
      %p89 = scmp.ne.s32.totalorder %s81, %s83
      %p90 = scmp.eq.s32.totalorder %s31, 14
      %p91 = por %p89, %p90
      %p92 = scmp.ne.s32.totalorder %s83, %s84
      %p93 = scmp.eq.s32.totalorder %s31, 0
      %p94 = por %p92, %p93
      %p95 = scmp.ne.s32.totalorder %s83, %s84
      %p96 = scmp.eq.s32.totalorder %s32, 14
      %p97 = por %p95, %p96
      %p99 = scmp.ne.s32.totalorder %s84, %s98
      %p100 = scmp.eq.s32.totalorder %s32, 0
      %p101 = por %p99, %p100
      %s103 = sadd.s32 %s102, 1
      %p106 = scmp.eq.s32.totalorder %s26, 14
      %p107 = scmp.ne.s32.totalorder %s102, %s104
      %p108 = scmp.eq.s32.totalorder %s26, 0
      %p109 = por %p107, %p108
      %p110 = scmp.ne.s32.totalorder %s102, %s104
      %p111 = scmp.eq.s32.totalorder %s31, 14
      %p112 = por %p110, %p111
      %p113 = scmp.ne.s32.totalorder %s104, %s105
      %p114 = scmp.eq.s32.totalorder %s31, 0
      %p115 = por %p113, %p114
      %p116 = scmp.ne.s32.totalorder %s104, %s105
      %p117 = scmp.eq.s32.totalorder %s32, 14
      %p118 = por %p116, %p117
      %p120 = scmp.ne.s32.totalorder %s105, %s119
      %p121 = scmp.eq.s32.totalorder %s32, 0
      %p122 = por %p120, %p121
      %s124 = sadd.s32 %s123, 1
      %p127 = scmp.eq.s32.totalorder %s26, 14
      %p128 = scmp.ne.s32.totalorder %s123, %s125
      %p129 = scmp.eq.s32.totalorder %s26, 0
      %p130 = por %p128, %p129
      %p131 = scmp.ne.s32.totalorder %s123, %s125
      %p132 = scmp.eq.s32.totalorder %s31, 14
      %p133 = por %p131, %p132
      %p134 = scmp.ne.s32.totalorder %s125, %s126
      %p135 = scmp.eq.s32.totalorder %s31, 0
      %p136 = por %p134, %p135
      %p137 = scmp.ne.s32.totalorder %s125, %s126
      %p138 = scmp.eq.s32.totalorder %s32, 14
      %p139 = por %p137, %p138
      %p141 = scmp.ne.s32.totalorder %s126, %s140
      %p142 = scmp.eq.s32.totalorder %s32, 0
      %p143 = por %p141, %p142
      %s145 = sadd.s32 %s144, 1
      %p148 = scmp.eq.s32.totalorder %s26, 14
      %p149 = scmp.ne.s32.totalorder %s144, %s146
      %p150 = scmp.eq.s32.totalorder %s26, 0
      %p151 = por %p149, %p150
      %p152 = scmp.ne.s32.totalorder %s144, %s146
      %p153 = scmp.eq.s32.totalorder %s31, 14
      %p154 = por %p152, %p153
      %p155 = scmp.ne.s32.totalorder %s146, %s147
      %p156 = scmp.eq.s32.totalorder %s31, 0
      %p157 = por %p155, %p156
      %p158 = scmp.ne.s32.totalorder %s146, %s147
      %p159 = scmp.eq.s32.totalorder %s32, 14
      %p160 = por %p158, %p159
      %p162 = scmp.ne.s32.totalorder %s147, %s161
      %p163 = scmp.eq.s32.totalorder %s32, 0
      %p164 = por %p162, %p163
      %s166 = sadd.s32 %s165, 1
      %p169 = scmp.eq.s32.totalorder %s26, 14
      %p170 = scmp.ne.s32.totalorder %s165, %s167
      %p171 = scmp.eq.s32.totalorder %s26, 0
      %p172 = por %p170, %p171
      %p173 = scmp.ne.s32.totalorder %s165, %s167
      %p174 = scmp.eq.s32.totalorder %s31, 14
      %p175 = por %p173, %p174
      %p176 = scmp.ne.s32.totalorder %s167, %s168
      %p177 = scmp.eq.s32.totalorder %s31, 0
      %p178 = por %p176, %p177
      %p179 = scmp.ne.s32.totalorder %s167, %s168
      %p180 = scmp.eq.s32.totalorder %s32, 14
      %p181 = por %p179, %p180
      %p183 = scmp.ne.s32.totalorder %s168, %s182
      %p184 = scmp.eq.s32.totalorder %s32, 0
      %p185 = por %p183, %p184
      %s187 = sadd.s32 %s186, 1
      %p190 = scmp.eq.s32.totalorder %s26, 14
      %p191 = scmp.ne.s32.totalorder %s186, %s188
      %p192 = scmp.eq.s32.totalorder %s26, 0
      %p193 = por %p191, %p192
      %p194 = scmp.ne.s32.totalorder %s186, %s188
      %p195 = scmp.eq.s32.totalorder %s31, 14
      %p196 = por %p194, %p195
      %p197 = scmp.ne.s32.totalorder %s188, %s189
      %p198 = scmp.eq.s32.totalorder %s31, 0
      %p199 = por %p197, %p198
      %p200 = scmp.ne.s32.totalorder %s188, %s189
      %p201 = scmp.eq.s32.totalorder %s32, 14
      %p202 = por %p200, %p201
      %p204 = scmp.ne.s32.totalorder %s189, %s203
      %p205 = scmp.eq.s32.totalorder %s32, 0
      %p206 = por %p204, %p205
      %s208 = sadd.s32 %s207, 1
      %p211 = scmp.eq.s32.totalorder %s26, 14
      %p212 = scmp.ne.s32.totalorder %s207, %s209
      %p213 = scmp.eq.s32.totalorder %s26, 0
      %p214 = por %p212, %p213
      %p215 = scmp.ne.s32.totalorder %s207, %s209
      %p216 = scmp.eq.s32.totalorder %s31, 14
      %p217 = por %p215, %p216
      %p218 = scmp.ne.s32.totalorder %s209, %s210
      %p219 = scmp.eq.s32.totalorder %s31, 0
      %p220 = por %p218, %p219
      %p221 = scmp.ne.s32.totalorder %s209, %s210
      %p222 = scmp.eq.s32.totalorder %s32, 14
      %p223 = por %p221, %p222
      %p225 = scmp.ne.s32.totalorder %s210, %s224
      %p226 = scmp.eq.s32.totalorder %s32, 0
      %p227 = por %p225, %p226
      %s229 = sadd.s32 %s228, 1
      %p232 = scmp.eq.s32.totalorder %s26, 14
      %p233 = scmp.ne.s32.totalorder %s228, %s230
      %p234 = scmp.eq.s32.totalorder %s26, 0
      %p235 = por %p233, %p234
      %p236 = scmp.ne.s32.totalorder %s228, %s230
      %p237 = scmp.eq.s32.totalorder %s31, 14
      %p238 = por %p236, %p237
      %p239 = scmp.ne.s32.totalorder %s230, %s231
      %p240 = scmp.eq.s32.totalorder %s31, 0
      %p241 = por %p239, %p240
      %p242 = scmp.ne.s32.totalorder %s230, %s231
      %p243 = scmp.eq.s32.totalorder %s32, 14
      %p244 = por %p242, %p243
      %p246 = scmp.ne.s32.totalorder %s231, %s245
      %p247 = scmp.eq.s32.totalorder %s32, 0
      %p248 = por %p246, %p247
      %s250 = sadd.s32 %s249, 1
      %p253 = scmp.eq.s32.totalorder %s26, 14
      %p254 = scmp.ne.s32.totalorder %s249, %s251
      %p255 = scmp.eq.s32.totalorder %s26, 0
      %p256 = por %p254, %p255
      %p257 = scmp.ne.s32.totalorder %s249, %s251
      %p258 = scmp.eq.s32.totalorder %s31, 14
      %p259 = por %p257, %p258
      %p260 = scmp.ne.s32.totalorder %s251, %s252
      %p261 = scmp.eq.s32.totalorder %s31, 0
      %p262 = por %p260, %p261
      %p263 = scmp.ne.s32.totalorder %s251, %s252
      %p264 = scmp.eq.s32.totalorder %s32, 14
      %p265 = por %p263, %p264
      %p267 = scmp.ne.s32.totalorder %s252, %s266
      %p268 = scmp.eq.s32.totalorder %s32, 0
      %p269 = por %p267, %p268
      %s271 = sadd.s32 %s270, 1
      %p274 = scmp.eq.s32.totalorder %s26, 14
      %p275 = scmp.ne.s32.totalorder %s270, %s272
      %p276 = scmp.eq.s32.totalorder %s26, 0
      %p277 = por %p275, %p276
      %p278 = scmp.ne.s32.totalorder %s270, %s272
      %p279 = scmp.eq.s32.totalorder %s31, 14
      %p280 = por %p278, %p279
      %p281 = scmp.ne.s32.totalorder %s272, %s273
      %p282 = scmp.eq.s32.totalorder %s31, 0
      %p283 = por %p281, %p282
      %p284 = scmp.ne.s32.totalorder %s272, %s273
      %p285 = scmp.eq.s32.totalorder %s32, 14
      %p286 = por %p284, %p285
      %p288 = scmp.ne.s32.totalorder %s273, %s287
      %p289 = scmp.eq.s32.totalorder %s32, 0
      %p290 = por %p288, %p289
      %s292 = sadd.s32 %s291, 1
      %p295 = scmp.eq.s32.totalorder %s26, 14
      %p296 = scmp.ne.s32.totalorder %s291, %s293
      %p297 = scmp.eq.s32.totalorder %s26, 0
      %p298 = por %p296, %p297
      %p299 = scmp.ne.s32.totalorder %s291, %s293
      %p300 = scmp.eq.s32.totalorder %s31, 14
      %p301 = por %p299, %p300
      %p302 = scmp.ne.s32.totalorder %s293, %s294
      %p303 = scmp.eq.s32.totalorder %s31, 0
      %p304 = por %p302, %p303
      %p305 = scmp.ne.s32.totalorder %s293, %s294
      %p306 = scmp.eq.s32.totalorder %s32, 14
      %p307 = por %p305, %p306
      %p309 = scmp.ne.s32.totalorder %s294, %s308
      %p310 = scmp.eq.s32.totalorder %s32, 0
      %p311 = por %p309, %p310
      %s312 = ssub.s32 %s26, %s33
      %p313 = scmp.eq.s32.totalorder %s312, 0
      %s315 = sadd.s32 %s314, 1
      %s316 = scalar_select %p313, %s314, %s315
      %p319 = pneg %p313
      %p320 = scmp.eq.s32.totalorder %s26, 14
      %p321 = por %p319, %p320
      %p322 = scmp.ne.s32.totalorder %s314, %s317
      %p323 = scmp.eq.s32.totalorder %s26, 0
      %p324 = por %p322, %p323
      %p325 = scmp.ne.s32.totalorder %s314, %s317
      %p326 = scmp.eq.s32.totalorder %s31, 14
      %p327 = por %p325, %p326
      %p328 = scmp.ne.s32.totalorder %s317, %s318
      %p329 = scmp.eq.s32.totalorder %s31, 0
      %p330 = por %p328, %p329
      %p331 = scmp.ne.s32.totalorder %s317, %s318
      %p332 = scmp.eq.s32.totalorder %s32, 14
      %p333 = por %p331, %p332
      %p335 = scmp.ne.s32.totalorder %s318, %s334
      %p336 = scmp.eq.s32.totalorder %s32, 0
      %p337 = por %p335, %p336
      %s339 = sadd.s32 %s338, 1
      %p342 = scmp.eq.s32.totalorder %s26, 14
      %p343 = scmp.ne.s32.totalorder %s338, %s340
      %p344 = scmp.eq.s32.totalorder %s26, 0
      %p345 = por %p343, %p344
      %p346 = scmp.ne.s32.totalorder %s338, %s340
      %p347 = scmp.eq.s32.totalorder %s31, 14
      %p348 = por %p346, %p347
      %p349 = scmp.ne.s32.totalorder %s340, %s341
      %p350 = scmp.eq.s32.totalorder %s31, 0
      %p351 = por %p349, %p350
      %p352 = scmp.ne.s32.totalorder %s340, %s341
      %p353 = scmp.eq.s32.totalorder %s32, 14
      %p354 = por %p352, %p353
      %p356 = scmp.ne.s32.totalorder %s341, %s355
      %p357 = scmp.eq.s32.totalorder %s32, 0
      %p358 = por %p356, %p357
      %s360 = sadd.s32 %s359, 1
      %p363 = scmp.eq.s32.totalorder %s26, 14
      %p364 = scmp.ne.s32.totalorder %s359, %s361
      %p365 = scmp.eq.s32.totalorder %s26, 0
      %p366 = por %p364, %p365
      %p367 = scmp.ne.s32.totalorder %s359, %s361
      %p368 = scmp.eq.s32.totalorder %s31, 14
      %p369 = por %p367, %p368
      %p370 = scmp.ne.s32.totalorder %s361, %s362
      %p371 = scmp.eq.s32.totalorder %s31, 0
      %p372 = por %p370, %p371
      %p373 = scmp.ne.s32.totalorder %s361, %s362
      %p374 = scmp.eq.s32.totalorder %s32, 14
      %p375 = por %p373, %p374
      %p377 = scmp.ne.s32.totalorder %s362, %s376
      %p378 = scmp.eq.s32.totalorder %s32, 0
      %p379 = por %p377, %p378
      %p380 = scmp.le.s32.totalorder 1, %s26
      %p381 = scmp.lt.s32.totalorder %s26, 16
      %p382 = pnand %p380, %p381
      %p383 = pneg %p382
      // Predicated region
      $region9: #{tpu_custom_call.1} parent=5 // pred_check
        _
      $region10: #{tpu_custom_call.1} parent=5 // pred_check_branch
        %385 = sbr.rel (%p382) target = $region12
      $region11: #{tpu_custom_call.1} parent=5 // pred_region
        %s386 = ssub.s32 %s26, 1
        // Predicated region
        $region13: #{tpu_custom_call.1} parent=11 // pred_check
          %p387 = pneg %p73
        $region14: #{tpu_custom_call.1} parent=11 // pred_check_branch
          %389 = sbr.rel (%p387) target = $region16
        $region15: #{tpu_custom_call.1} parent=11 // pred_region
          _
        $region16: #{tpu_custom_call.1} parent=11 // pred_fallthru
          _
        // Predicated region
        $region17: #{tpu_custom_call.1} parent=11 // pred_check
          %p390 = pneg %p94
        $region18: #{tpu_custom_call.1} parent=11 // pred_check_branch
          %392 = sbr.rel (%p390) target = $region20
        $region19: #{tpu_custom_call.1} parent=11 // pred_region
          _
        $region20: #{tpu_custom_call.1} parent=11 // pred_fallthru
          _
        // Predicated region
        $region21: #{tpu_custom_call.1} parent=11 // pred_check
          %p393 = pneg %p115
        $region22: #{tpu_custom_call.1} parent=11 // pred_check_branch
          %395 = sbr.rel (%p393) target = $region24
        $region23: #{tpu_custom_call.1} parent=11 // pred_region
          _
        $region24: #{tpu_custom_call.1} parent=11 // pred_fallthru
          _
        // Predicated region
        $region25: #{tpu_custom_call.1} parent=11 // pred_check
          %p396 = pneg %p136
        $region26: #{tpu_custom_call.1} parent=11 // pred_check_branch
          %398 = sbr.rel (%p396) target = $region28
        $region27: #{tpu_custom_call.1} parent=11 // pred_region
          _
        $region28: #{tpu_custom_call.1} parent=11 // pred_fallthru
          _
        // Predicated region
        $region29: #{tpu_custom_call.1} parent=11 // pred_check
          %p399 = pneg %p157
        $region30: #{tpu_custom_call.1} parent=11 // pred_check_branch
          %401 = sbr.rel (%p399) target = $region32
        $region31: #{tpu_custom_call.1} parent=11 // pred_region
          _
        $region32: #{tpu_custom_call.1} parent=11 // pred_fallthru
          _
        // Predicated region
        $region33: #{tpu_custom_call.1} parent=11 // pred_check
          %p402 = pneg %p178
        $region34: #{tpu_custom_call.1} parent=11 // pred_check_branch
          %404 = sbr.rel (%p402) target = $region36
        $region35: #{tpu_custom_call.1} parent=11 // pred_region
          _
        $region36: #{tpu_custom_call.1} parent=11 // pred_fallthru
          _
        // Predicated region
        $region37: #{tpu_custom_call.1} parent=11 // pred_check
          %p405 = pneg %p199
        $region38: #{tpu_custom_call.1} parent=11 // pred_check_branch
          %407 = sbr.rel (%p405) target = $region40
        $region39: #{tpu_custom_call.1} parent=11 // pred_region
          _
        $region40: #{tpu_custom_call.1} parent=11 // pred_fallthru
          _
        // Predicated region
        $region41: #{tpu_custom_call.1} parent=11 // pred_check
          %p408 = pneg %p220
        $region42: #{tpu_custom_call.1} parent=11 // pred_check_branch
          %410 = sbr.rel (%p408) target = $region44
        $region43: #{tpu_custom_call.1} parent=11 // pred_region
          _
        $region44: #{tpu_custom_call.1} parent=11 // pred_fallthru
          _
        // Predicated region
        $region45: #{tpu_custom_call.1} parent=11 // pred_check
          %p411 = pneg %p241
        $region46: #{tpu_custom_call.1} parent=11 // pred_check_branch
          %413 = sbr.rel (%p411) target = $region48
        $region47: #{tpu_custom_call.1} parent=11 // pred_region
          _
        $region48: #{tpu_custom_call.1} parent=11 // pred_fallthru
          _
        // Predicated region
        $region49: #{tpu_custom_call.1} parent=11 // pred_check
          %p414 = pneg %p262
        $region50: #{tpu_custom_call.1} parent=11 // pred_check_branch
          %416 = sbr.rel (%p414) target = $region52
        $region51: #{tpu_custom_call.1} parent=11 // pred_region
          _
        $region52: #{tpu_custom_call.1} parent=11 // pred_fallthru
          _
        // Predicated region
        $region53: #{tpu_custom_call.1} parent=11 // pred_check
          %p417 = pneg %p283
        $region54: #{tpu_custom_call.1} parent=11 // pred_check_branch
          %419 = sbr.rel (%p417) target = $region56
        $region55: #{tpu_custom_call.1} parent=11 // pred_region
          _
        $region56: #{tpu_custom_call.1} parent=11 // pred_fallthru
          _
        // Predicated region
        $region57: #{tpu_custom_call.1} parent=11 // pred_check
          %p420 = pneg %p304
        $region58: #{tpu_custom_call.1} parent=11 // pred_check_branch
          %422 = sbr.rel (%p420) target = $region60
        $region59: #{tpu_custom_call.1} parent=11 // pred_region
          _
        $region60: #{tpu_custom_call.1} parent=11 // pred_fallthru
          _
      $region12: #{tpu_custom_call.1} parent=5 // pred_fallthru
        _
      %p423 = scmp.lt.s32.totalorder %s26, 15
      // Predicated region
      $region61: #{tpu_custom_call.1} parent=5 // pred_check
        %p424 = pneg %p423
      $region62: #{tpu_custom_call.1} parent=5 // pred_check_branch
        %426 = sbr.rel (%p424) target = $region64
      $region63: #{tpu_custom_call.1} parent=5 // pred_region
        // Predicated region
        $region65: #{tpu_custom_call.1} parent=63 // pred_check
          %p427 = pneg %p46
        $region66: #{tpu_custom_call.1} parent=63 // pred_check_branch
          %429 = sbr.rel (%p427) target = $region68
        $region67: #{tpu_custom_call.1} parent=63 // pred_region
          %p430 = scmp.lt.s32.totalorder %s26, 14
          %s431 = scalar_select %p430, %s26, 14
          %s432 = smul.addr %s431, 2
          %s433 = scalar_lea.vmem %s0, %s432
        $region68: #{tpu_custom_call.1} parent=63 // pred_fallthru
          _
      $region64: #{tpu_custom_call.1} parent=5 // pred_fallthru
        _
      %p434 = scmp.le.s32.totalorder 1, %s26
      %p435 = scmp.lt.s32.totalorder %s26, 16
      %p436 = pnand %p434, %p435
      %p437 = pneg %p436
      // Predicated region
      $region69: #{tpu_custom_call.1} parent=5 // pred_check
        _
      $region70: #{tpu_custom_call.1} parent=5 // pred_check_branch
        %439 = sbr.rel (%p436) target = $region72
      $region71: #{tpu_custom_call.1} parent=5 // pred_region
        %s440 = ssub.s32 %s26, 1
        %p441 = scmp.lt.s32.totalorder %s31, 14
        %s442 = scalar_select %p441, %s31, 14
        %s443 = smul.addr %s442, 2
        %s444 = scalar_lea.vmem %s0, %s443
        %p445 = pneg %p52
        %p446 = pneg %p49
        %p447 = pneg %p73
        %p448 = pneg %p70
        %p449 = pneg %p94
        %p450 = pneg %p91
        %p451 = pneg %p115
        %p452 = pneg %p112
        %p453 = pneg %p136
        %p454 = pneg %p133
        %p455 = pneg %p157
        %p456 = pneg %p154
        %p457 = pneg %p178
        %p458 = pneg %p175
        %p459 = pneg %p199
        %p460 = pneg %p196
        %p461 = pneg %p220
        %p462 = pneg %p217
        %p463 = pneg %p241
        %p464 = pneg %p238
        %p465 = pneg %p262
        %p466 = pneg %p259
        %p467 = pneg %p283
        %p468 = pneg %p280
        %p469 = pneg %p304
        %p470 = pneg %p301
        %p471 = pneg %p330
        %p472 = pneg %p327
        %s473 = sand.u32 %s317, 1
        %s474 = scalar_lea.sflag [#allocation7], %s473
        %s475 = sand.u32 %s317, 1
        %s476 = smul.addr %s475, 2
        %s477 = scalar_lea.vmem [#allocation6], %s476
        %p478 = pneg %p351
        %p479 = pneg %p348
        %p480 = pneg %p372
        %p481 = pneg %p369
        %p482 = scmp.lt.s32.totalorder %s31, 14
        %s483 = scalar_select %p482, %s31, 14
        %s484 = smul.addr %s483, 2
        %s485 = scalar_lea.vmem %s0, %s484
        %p486 = scmp.eq.s32.totalorder %s31, 0
        // Predicated region
        $region73: #{tpu_custom_call.1} parent=71 // pred_check
          %p487 = pneg %p486
        $region74: #{tpu_custom_call.1} parent=71 // pred_check_branch
          %489 = sbr.rel (%p487) target = $region76
        $region75: #{tpu_custom_call.1} parent=71 // pred_region
          %v490 = vld [vmem:[%s3] sm:$0x3]
          %vm491 = vcmask 254976
          %492 = vst.msk [vmem:[#allocation3] sm:$0x3] %vm491, %v490
          %v493 = vld [vmem:[%s4] sm:$0x3]
          %494 = vst.msk [vmem:[#allocation4] sm:$0x3] %vm491, %v493
          %v495 = vld [vmem:[%s1] sm:$0xff]
          %v496 = vld [vmem:[%s1 + $0x8] sm:$0x7f]
          %v497 = vld [vmem:[%s6] sm:$0xff]
          %v498 = vld [vmem:[%s6 + $0x8] sm:$0xff]
          %v499 = vld [vmem:[%s6 + $0x10] sm:$0xff]
          %v500 = vld [vmem:[%s6 + $0x18] sm:$0xff]
          %v501 = vld [vmem:[%s6 + $0x20] sm:$0xff]
          %v502 = vld [vmem:[%s6 + $0x28] sm:$0xff]
          %v503 = vld [vmem:[%s6 + $0x30] sm:$0xff]
          %v504 = vld [vmem:[%s6 + $0x38] sm:$0xff]
          %v505 = vld [vmem:[%s7] sm:$0x1]
          %v507 = vlaneseq
          %v508 = vshrl.u32 %v507, 7
          %v509 = vsub.s32 0, %v508
          %v510 = vrot.slane %v505, %v509
          %vm512 = vcmask 523264
          %v514 = vsel %vm512, %v495, 0
          %v517 = vsel %vm512, %v496, 0
          %519 = vmatprep.subr.mxu0 0.0
          %520 = vmatpush1.msra.mxu0 %v497
          %521 = vmatprep.subr.mxu0 0.0
          %522 = vmatpush1.msra.mxu0 %v498
          %523 = vmatprep.subr.mxu0 0.0
          %524 = vmatpush1.msra.mxu0 %v499
          %525 = vmatprep.subr.mxu0 0.0
          %526 = vmatpush1.msra.mxu0 %v500
          %527 = vmatprep.subr.mxu0 0.0
          %528 = vmatpush1.msra.mxu0 %v501
          %529 = vmatprep.subr.mxu0 0.0
          %530 = vmatpush1.msra.mxu0 %v502
          %531 = vmatprep.subr.mxu0 0.0
          %532 = vmatpush1.msra.mxu0 %v503
          %533 = vmatprep.subr.mxu0 0.0
          %534 = vmatpush1.msra.mxu0 %v504
          %535 = vmatprep.subr.mxu0 0.0
          %536 = vmatpush1.msra.mxu0 0.0
          %537 = vmatprep.subr.mxu0 0.0
          %538 = vmatpush1.msra.mxu0 0.0
          %539 = vmatprep.subr.mxu0 0.0
          %540 = vmatpush1.msra.mxu0 0.0
          %541 = vmatprep.subr.mxu0 0.0
          %542 = vmatpush1.msra.mxu0 0.0
          %543 = vmatprep.subr.mxu0 0.0
          %544 = vmatpush1.msra.mxu0 0.0
          %545 = vmatprep.subr.mxu0 0.0
          %546 = vmatpush1.msra.mxu0 0.0
          %547 = vmatprep.subr.mxu0 0.0
          %548 = vmatpush1.msra.mxu0 0.0
          %549 = vmatprep.subr.mxu0 0.0
          %550 = vmatpush1.msra.mxu0 0.0
          %551 = vmatprep.subr.mxu0 0.0
          %552 = vmatpush1.msra.mxu0 0.0
          %553 = vmatprep.subr.mxu0 0.0
          %554 = vmatpush1.msra.mxu0 0.0
          %555 = vmatprep.subr.mxu0 0.0
          %556 = vmatpush1.msra.mxu0 0.0
          %557 = vmatprep.subr.mxu0 0.0
          %558 = vmatpush1.msra.mxu0 0.0
          %559 = vmatprep.subr.mxu0 0.0
          %560 = vmatpush1.msra.mxu0 0.0
          %561 = vmatprep.subr.mxu0 0.0
          %562 = vmatpush1.msra.mxu0 0.0
          %563 = vmatprep.subr.mxu0 0.0
          %564 = vmatpush1.msra.mxu0 0.0
          %565 = vmatprep.subr.mxu0 0.0
          %566 = vmatpush1.msra.mxu0 0.0
          %567 = vmatprep.subr.mxu0 0.0
          %568 = vmatpush1.msra.mxu0 0.0
          %569 = vmatprep.subr.mxu0 0.0
          %570 = vmatpush1.msra.mxu0 0.0
          %571 = vmatprep.subr.mxu0 0.0
          %572 = vmatpush1.msra.mxu0 0.0
          %573 = vmatprep.subr.mxu0 0.0
          %574 = vmatpush1.msra.mxu0 0.0
          %575 = vmatprep.subr.mxu0 0.0
          %576 = vmatpush1.msra.mxu0 0.0
          %577 = vmatprep.subr.mxu0 0.0
          %578 = vmatpush1.msra.mxu0 0.0
          %579 = vmatprep.subr.mxu0 0.0
          %580 = vmatpush1.msra.mxu0 0.0
          %581 = vmatprep.subr.mxu0 0.0
          %582 = vmatpush1.msra.mxu0 0.0
          %583 = vmatprep.mubr.f32.mxu0 0.0
          %584 = vmatmul.mubr.f32.gmra.mrb[0].mxu0 %v514
          %v585 = vpop.f32.mrb[0].mxu0
          %v586 = vadd.f32 %v510, %v585
          %v587 = vpop.f32.mrb[0].mxu0
          %588 = vmatprep.mubr.f32.mxu0 0.0
          %589 = vmatmul.mubr.f32.gmra.mrb[0].mxu0 %v517
          %v590 = vpop.f32.mrb[0].mxu0
          %v591 = vadd.f32 %v510, %v590
          %v592 = vpop.f32.mrb[0].mxu0
          %593 = vdwg.mxu0
          %vm594 = vcmask 261120
          %595 = vst.msk [vmem:[#allocation2] sm:$0xff] %vm594, %v586
          %vm596 = vcmask 260096
          %597 = vst.msk [vmem:[#allocation2 + $0x8] sm:$0x7f] %vm596, %v591
          %s598 = scalar_lea.vmem %s1, 16
          %v599 = vld [vmem:[%s598] sm:$0xff]
          %v600 = vld [vmem:[%s598 + $0x8] sm:$0x7f]
          %v601 = vld [vmem:[%s6] sm:$0xff]
          %v602 = vld [vmem:[%s6 + $0x8] sm:$0xff]
          %v603 = vld [vmem:[%s6 + $0x10] sm:$0xff]
          %v604 = vld [vmem:[%s6 + $0x18] sm:$0xff]
          %v605 = vld [vmem:[%s6 + $0x20] sm:$0xff]
          %v606 = vld [vmem:[%s6 + $0x28] sm:$0xff]
          %v607 = vld [vmem:[%s6 + $0x30] sm:$0xff]
          %v608 = vld [vmem:[%s6 + $0x38] sm:$0xff]
          %v609 = vld [vmem:[%s7] sm:$0x1]
          %v611 = vlaneseq
          %v612 = vshrl.u32 %v611, 7
          %v613 = vsub.s32 0, %v612
          %v614 = vrot.slane %v609, %v613
          %v617 = vsel %vm512, %v599, 0
          %v620 = vsel %vm512, %v600, 0
          %622 = vmatprep.subr.mxu0 0.0
          %623 = vmatpush1.msra.mxu0 %v601
          %624 = vmatprep.subr.mxu0 0.0
          %625 = vmatpush1.msra.mxu0 %v602
          %626 = vmatprep.subr.mxu0 0.0
          %627 = vmatpush1.msra.mxu0 %v603
          %628 = vmatprep.subr.mxu0 0.0
          %629 = vmatpush1.msra.mxu0 %v604
          %630 = vmatprep.subr.mxu0 0.0
          %631 = vmatpush1.msra.mxu0 %v605
          %632 = vmatprep.subr.mxu0 0.0
          %633 = vmatpush1.msra.mxu0 %v606
          %634 = vmatprep.subr.mxu0 0.0
          %635 = vmatpush1.msra.mxu0 %v607
          %636 = vmatprep.subr.mxu0 0.0
          %637 = vmatpush1.msra.mxu0 %v608
          %638 = vmatprep.subr.mxu0 0.0
          %639 = vmatpush1.msra.mxu0 0.0
          %640 = vmatprep.subr.mxu0 0.0
          %641 = vmatpush1.msra.mxu0 0.0
          %642 = vmatprep.subr.mxu0 0.0
          %643 = vmatpush1.msra.mxu0 0.0
          %644 = vmatprep.subr.mxu0 0.0
          %645 = vmatpush1.msra.mxu0 0.0
          %646 = vmatprep.subr.mxu0 0.0
          %647 = vmatpush1.msra.mxu0 0.0
          %648 = vmatprep.subr.mxu0 0.0
          %649 = vmatpush1.msra.mxu0 0.0
          %650 = vmatprep.subr.mxu0 0.0
          %651 = vmatpush1.msra.mxu0 0.0
          %652 = vmatprep.subr.mxu0 0.0
          %653 = vmatpush1.msra.mxu0 0.0
          %654 = vmatprep.subr.mxu0 0.0
          %655 = vmatpush1.msra.mxu0 0.0
          %656 = vmatprep.subr.mxu0 0.0
          %657 = vmatpush1.msra.mxu0 0.0
          %658 = vmatprep.subr.mxu0 0.0
          %659 = vmatpush1.msra.mxu0 0.0
          %660 = vmatprep.subr.mxu0 0.0
          %661 = vmatpush1.msra.mxu0 0.0
          %662 = vmatprep.subr.mxu0 0.0
          %663 = vmatpush1.msra.mxu0 0.0
          %664 = vmatprep.subr.mxu0 0.0
          %665 = vmatpush1.msra.mxu0 0.0
          %666 = vmatprep.subr.mxu0 0.0
          %667 = vmatpush1.msra.mxu0 0.0
          %668 = vmatprep.subr.mxu0 0.0
          %669 = vmatpush1.msra.mxu0 0.0
          %670 = vmatprep.subr.mxu0 0.0
          %671 = vmatpush1.msra.mxu0 0.0
          %672 = vmatprep.subr.mxu0 0.0
          %673 = vmatpush1.msra.mxu0 0.0
          %674 = vmatprep.subr.mxu0 0.0
          %675 = vmatpush1.msra.mxu0 0.0
          %676 = vmatprep.subr.mxu0 0.0
          %677 = vmatpush1.msra.mxu0 0.0
          %678 = vmatprep.subr.mxu0 0.0
          %679 = vmatpush1.msra.mxu0 0.0
          %680 = vmatprep.subr.mxu0 0.0
          %681 = vmatpush1.msra.mxu0 0.0
          %682 = vmatprep.subr.mxu0 0.0
          %683 = vmatpush1.msra.mxu0 0.0
          %684 = vmatprep.subr.mxu0 0.0
          %685 = vmatpush1.msra.mxu0 0.0
          %686 = vmatprep.mubr.f32.mxu0 0.0
          %687 = vmatmul.mubr.f32.gmra.mrb[0].mxu0 %v617
          %v688 = vpop.f32.mrb[0].mxu0
          %v689 = vadd.f32 %v614, %v688
          %v690 = vpop.f32.mrb[0].mxu0
          %691 = vmatprep.mubr.f32.mxu0 0.0
          %692 = vmatmul.mubr.f32.gmra.mrb[0].mxu0 %v620
          %v693 = vpop.f32.mrb[0].mxu0
          %v694 = vadd.f32 %v614, %v693
          %v695 = vpop.f32.mrb[0].mxu0
          %696 = vdwg.mxu0
          %s697 = scalar_lea.vmem [#allocation2], 16
          %698 = vst.msk [vmem:[%s697] sm:$0xff] %vm594, %v689
          %699 = vst.msk [vmem:[%s697 + $0x8] sm:$0x7f] %vm596, %v694
        $region76: #{tpu_custom_call.1} parent=71 // pred_fallthru
          _
        %v700 = vld [vmem:[%s485] sm:$0x3]
        %v701 = vld [vmem:[#allocation3] sm:$0x3]
        %v702 = vld [vmem:[#allocation4] sm:$0x3]
        %v703 = vld [vmem:[%s1] sm:$0xff]
        %v704 = vld [vmem:[%s1 + $0x8] sm:$0x7f]
        %v705 = vld [vmem:[%s1 + $0x10] sm:$0xff]
        %v706 = vld [vmem:[%s1 + $0x18] sm:$0x7f]
        %v707 = vld [vmem:[%s2] sm:$0x3]
        %v708 = vld [vmem:[%s5] sm:$0xff]
        %v709 = vld [vmem:[%s5 + $0x8] sm:$0xff]
        %v710 = vld [vmem:[%s5 + $0x10] sm:$0xff]
        %v711 = vld [vmem:[%s5 + $0x18] sm:$0xff]
        %vm712 = vcmask 261120
        %v714 = vsel %vm712, %v701, 0
        %716 = vmatprep.subr.mxu0 0.0
        %717 = vmatpush1.msra.mxu0 %v708
        %718 = vmatprep.subr.mxu0 0.0
        %719 = vmatpush1.msra.mxu0 %v709
        %720 = vmatprep.subr.mxu0 0.0
        %721 = vmatpush1.msra.mxu0 %v710
        %722 = vmatprep.subr.mxu0 0.0
        %723 = vmatpush1.msra.mxu0 %v711
        %724 = vmatprep.subr.mxu0 0.0
        %725 = vmatpush1.msra.mxu0 0.0
        %726 = vmatprep.subr.mxu0 0.0
        %727 = vmatpush1.msra.mxu0 0.0
        %728 = vmatprep.subr.mxu0 0.0
        %729 = vmatpush1.msra.mxu0 0.0
        %730 = vmatprep.subr.mxu0 0.0
        %731 = vmatpush1.msra.mxu0 0.0
        %732 = vmatprep.subr.mxu0 0.0
        %733 = vmatpush1.msra.mxu0 0.0
        %734 = vmatprep.subr.mxu0 0.0
        %735 = vmatpush1.msra.mxu0 0.0
        %736 = vmatprep.subr.mxu0 0.0
        %737 = vmatpush1.msra.mxu0 0.0
        %738 = vmatprep.subr.mxu0 0.0
        %739 = vmatpush1.msra.mxu0 0.0
        %740 = vmatprep.subr.mxu0 0.0
        %741 = vmatpush1.msra.mxu0 0.0
        %742 = vmatprep.subr.mxu0 0.0
        %743 = vmatpush1.msra.mxu0 0.0
        %744 = vmatprep.subr.mxu0 0.0
        %745 = vmatpush1.msra.mxu0 0.0
        %746 = vmatprep.subr.mxu0 0.0
        %747 = vmatpush1.msra.mxu0 0.0
        %748 = vmatprep.subr.mxu0 0.0
        %749 = vmatpush1.msra.mxu0 0.0
        %750 = vmatprep.subr.mxu0 0.0
        %751 = vmatpush1.msra.mxu0 0.0
        %752 = vmatprep.subr.mxu0 0.0
        %753 = vmatpush1.msra.mxu0 0.0
        %754 = vmatprep.subr.mxu0 0.0
        %755 = vmatpush1.msra.mxu0 0.0
        %756 = vmatprep.subr.mxu0 0.0
        %757 = vmatpush1.msra.mxu0 0.0
        %758 = vmatprep.subr.mxu0 0.0
        %759 = vmatpush1.msra.mxu0 0.0
        %760 = vmatprep.subr.mxu0 0.0
        %761 = vmatpush1.msra.mxu0 0.0
        %762 = vmatprep.subr.mxu0 0.0
        %763 = vmatpush1.msra.mxu0 0.0
        %764 = vmatprep.subr.mxu0 0.0
        %765 = vmatpush1.msra.mxu0 0.0
        %766 = vmatprep.subr.mxu0 0.0
        %767 = vmatpush1.msra.mxu0 0.0
        %768 = vmatprep.subr.mxu0 0.0
        %769 = vmatpush1.msra.mxu0 0.0
        %770 = vmatprep.subr.mxu0 0.0
        %771 = vmatpush1.msra.mxu0 0.0
        %772 = vmatprep.subr.mxu0 0.0
        %773 = vmatpush1.msra.mxu0 0.0
        %774 = vmatprep.subr.mxu0 0.0
        %775 = vmatpush1.msra.mxu0 0.0
        %776 = vmatprep.subr.mxu0 0.0
        %777 = vmatpush1.msra.mxu0 0.0
        %778 = vmatprep.subr.mxu0 0.0
        %779 = vmatpush1.msra.mxu0 0.0
        %780 = vmatprep.mubr.f32.mxu0 0.0
        %781 = vmatmul.mubr.f32.gmra.mrb[0].mxu0 %v714
        %v782 = vpop.f32.mrb[0].mxu0
        %v783 = vadd.f32 0.0, %v782
        %v784 = vpop.f32.mrb[0].mxu0
        %785 = vdwg.mxu0
        %v788 = vunpack.c.l.s4 1966171168
        %v789 = vunpack.c.0.s8 %v788
        %v790 = vlaneseq
        %v791 = vshrl.u32 %v790, 7
        %v792 = vsub.s32 %v789, %v791
        %v793 = vrot.slane %v783, %v792
        %v794 = vcombine.high %v793, %v793
        %v796 = vunpack.c.l.s4 1966171168
        %v797 = vunpack.c.0.s8 %v796
        %v798 = vlaneseq
        %v799 = vshrl.u32 %v798, 7
        %v800 = vsub.s32 %v797, %v799
        %v801 = vrot.slane %v793, %v800
        %v803 = vunpack.c.l.s4 1966171168
        %v804 = vunpack.c.0.s8 %v803
        %v805 = vlaneseq
        %v806 = vshrl.u32 %v805, 7
        %v807 = vsub.s32 %v804, %v806
        %v808 = vrot.slane %v794, %v807
        %v809 = vld [vmem:[#allocation2] sm:$0xff]
        %v810 = vld [vmem:[#allocation2 + $0x8] sm:$0x7f]
        %v811 = vld [vmem:[#allocation2 + $0x10] sm:$0xff]
        %v812 = vld [vmem:[#allocation2 + $0x18] sm:$0x7f]
        %v813 = vlaneseq
        %v814 = vshrl.u32 %v813, 7
        %v815 = vsub.s32 0, %v814
        %v816 = vrot.slane %v801, %v815
        %v817 = vlaneseq
        %v818 = vshrl.u32 %v817, 7
        %v819 = vsub.s32 0, %v818
        %v820 = vrot.slane %v808, %v819
        %v823 = vadd.f32 %v816, %v809
        %v824 = vadd.f32 %v816, %v810
        %v825 = vadd.f32 %v820, %v811
        %v826 = vadd.f32 %v820, %v812
        %v827 = vtanh.pop %v823
        %v828 = vtanh.pop %v824
        %v829 = vtanh.pop %v825
        %v830 = vtanh.pop %v826
        %v831 = vld [vmem:[%s8] sm:$0x1]
        %v833 = vlaneseq
        %v834 = vshrl.u32 %v833, 7
        %v835 = vsub.s32 0, %v834
        %v836 = vrot.slane %v831, %v835
        %v838 = vmul.f32 %v827, %v836
        %v839 = vmul.f32 %v828, %v836
        %v840 = vmul.f32 %v829, %v836
        %v841 = vmul.f32 %v830, %v836
        %v842 = vsel %vm712, %v838, 0.0
        %843 = vadd.xlane.f32.xlu0 %v842
        %v844 = vpop.xlane.xlu0 %843
        %vm845 = vcmask 260096
        %v846 = vsel %vm845, %v839, 0.0
        %847 = vadd.xlane.f32.xlu0 %v846
        %v848 = vpop.xlane.xlu0 %847
        %v849 = vsel %vm712, %v840, 0.0
        %850 = vadd.xlane.f32.xlu0 %v849
        %v851 = vpop.xlane.xlu0 %850
        %v852 = vsel %vm845, %v841, 0.0
        %853 = vadd.xlane.f32.xlu0 %v852
        %v854 = vpop.xlane.xlu0 %853
        %vm855 = vcmp.eq.s32.totalorder %v707, 0
        %v860 = vlaneseq
        %v861 = vand.u32 %v860, 127
        %v862 = vlaneseq
        %v863 = vshrl.u32 %v862, 7
        %v864 = vsub.s32 %v861, %v863
        %v865 = vrot.slane %v844, %v864
        %v866 = vadd.s32 %v861, 4294967288
        %v867 = vlaneseq
        %v868 = vshrl.u32 %v867, 7
        %v869 = vsub.s32 %v866, %v868
        %v870 = vrot.slane %v848, %v869
        %vm871 = vcmask 130112
        %v872 = vsel %vm871, %v870, %v865
        %v873 = vlaneseq
        %v874 = vshrl.u32 %v873, 7
        %v875 = vsub.s32 %v861, %v874
        %v876 = vrot.slane %v851, %v875
        %v877 = vlaneseq
        %v878 = vshrl.u32 %v877, 7
        %v879 = vsub.s32 %v866, %v878
        %v880 = vrot.slane %v854, %v879
        %v881 = vsel %vm871, %v880, %v876
        %vm882 = vcmask 1041409
        %v883 = vsel %vm882, %v881, %v872
        %v885 = vsel %vm855, -1e+09, %v883
        %vm886 = vcmask 115712
        %v887 = vsel %vm886, %v885, -inf
        %888 = vmax.xlane.f32.xlu0 %v887
        %v889 = vpop.xlane.xlu0 %888
        %v890 = vsub.f32 %v885, %v889
        %v891 = vmul.f32 %v890, 1.442695
        %v892 = vpow.pop %v891
        %v893 = vsel %vm886, %v892, 0.0
        %894 = vadd.xlane.f32.xlu0 %v893
        %v895 = vpop.xlane.xlu0 %894
        %v896 = vrcp.pop %v895
        %v897 = vmul.f32 %v892, %v896
        %v898 = vlaneseq
        %v899 = vshrl.u32 %v898, 7
        %v900 = vsub.s32 0, %v899
        %v901 = vrot.slane %v897, %v900
        %903 = vbcast.lane.b32.xlu0 %v901, 256
        %v904 = vpop.permute.xlu0 %903
        %s906 = sor.u32 256, 8
        %907 = vbcast.lane.b32.xlu0 %v901, %s906
        %v908 = vpop.permute.xlu0 %907
        %v909 = vlaneseq
        %v910 = vshrl.u32 %v909, 7
        %v911 = vsub.s32 1, %v910
        %v912 = vrot.slane %v897, %v911
        %914 = vbcast.lane.b32.xlu0 %v912, 256
        %v915 = vpop.permute.xlu0 %914
        %s917 = sor.u32 256, 8
        %918 = vbcast.lane.b32.xlu0 %v912, %s917
        %v919 = vpop.permute.xlu0 %918
        %v920 = vmul.f32 %v904, %v703
        %v921 = vmul.f32 %v908, %v704
        %v922 = vmul.f32 %v915, %v705
        %v923 = vmul.f32 %v919, %v706
        %vm924 = vcmask 523264
        %v925 = vsel %vm924, %v920, 0.0
        %vm926 = vcmask 522240
        %v927 = vsel %vm926, %v921, 0.0
        %v928 = vadd.f32 %v925, %v927
        %v929 = vrot.slane %v928, 4
        %v930 = vadd.f32 %v928, %v929
        %v931 = vrot.slane %v930, 2
        %v932 = vadd.f32 %v930, %v931
        %v933 = vrot.slane %v932, 1
        %v934 = vadd.f32 %v932, %v933
        %v935 = vsel %vm924, %v922, 0.0
        %v936 = vsel %vm926, %v923, 0.0
        %v937 = vadd.f32 %v935, %v936
        %v938 = vrot.slane %v937, 4
        %v939 = vadd.f32 %v937, %v938
        %v940 = vrot.slane %v939, 2
        %v941 = vadd.f32 %v939, %v940
        %v942 = vrot.slane %v941, 1
        %v943 = vadd.f32 %v941, %v942
        %vm944 = vcmask 254976
        %945 = vst.msk [vmem:[#allocation5] sm:$0x3] %vm944, %v700
        %v948 = vsel %vm882, %v943, %v934
        %949 = vrot.lane.b32.xlu0 %v948, 32
        %v950 = vpop.permute.xlu0 %949
        %vm952 = vcmask 779520
        %953 = vst.msk [vmem:[#allocation5] sm:$0x3] %vm952, %v950
        %954 = vrot.lane.b32.xlu0 %v701, 96
        %v955 = vpop.permute.xlu0 %954
        %vm957 = vcmask 1042176
        %958 = vst.msk [vmem:[#allocation5] sm:$0x3] %vm957, %v955
        %v959 = vld [vmem:[#allocation5] sm:$0x3]
        %v960 = vld [vmem:[%s9] sm:$0xff]
        %v961 = vld [vmem:[%s9 + $0x8] sm:$0xff]
        %v962 = vld [vmem:[%s9 + $0x10] sm:$0xff]
        %v963 = vld [vmem:[%s9 + $0x18] sm:$0xff]
        %v964 = vld [vmem:[%s9 + $0x20] sm:$0xff]
        %v965 = vld [vmem:[%s9 + $0x28] sm:$0xff]
        %v966 = vld [vmem:[%s9 + $0x30] sm:$0xff]
        %v967 = vld [vmem:[%s9 + $0x38] sm:$0xff]
        %v968 = vld [vmem:[%s9 + $0x40] sm:$0xff]
        %v969 = vld [vmem:[%s9 + $0x48] sm:$0xff]
        %v970 = vld [vmem:[%s9 + $0x50] sm:$0xff]
        %v971 = vld [vmem:[%s9 + $0x58] sm:$0xff]
        %v972 = vld [vmem:[%s9 + $0x60] sm:$0xff]
        %v973 = vld [vmem:[%s9 + $0x68] sm:$0xff]
        %v974 = vld [vmem:[%s9 + $0x70] sm:$0xff]
        %v975 = vld [vmem:[%s9 + $0x78] sm:$0xff]
        %v976 = vld [vmem:[%s10] sm:$0x1]
        %v978 = vlaneseq
        %v979 = vshrl.u32 %v978, 7
        %v980 = vsub.s32 0, %v979
        %v981 = vrot.slane %v976, %v980
        %983 = vmatprep.subr.mxu0 0.0
        %984 = vmatpush1.msra.mxu0 %v960
        %985 = vmatprep.subr.mxu0 0.0
        %986 = vmatpush1.msra.mxu0 %v961
        %987 = vmatprep.subr.mxu0 0.0
        %988 = vmatpush1.msra.mxu0 %v962
        %989 = vmatprep.subr.mxu0 0.0
        %990 = vmatpush1.msra.mxu0 %v963
        %991 = vmatprep.subr.mxu0 0.0
        %992 = vmatpush1.msra.mxu0 %v964
        %993 = vmatprep.subr.mxu0 0.0
        %994 = vmatpush1.msra.mxu0 %v965
        %995 = vmatprep.subr.mxu0 0.0
        %996 = vmatpush1.msra.mxu0 %v966
        %997 = vmatprep.subr.mxu0 0.0
        %998 = vmatpush1.msra.mxu0 %v967
        %999 = vmatprep.subr.mxu0 0.0
        %1000 = vmatpush1.msra.mxu0 %v968
        %1001 = vmatprep.subr.mxu0 0.0
        %1002 = vmatpush1.msra.mxu0 %v969
        %1003 = vmatprep.subr.mxu0 0.0
        %1004 = vmatpush1.msra.mxu0 %v970
        %1005 = vmatprep.subr.mxu0 0.0
        %1006 = vmatpush1.msra.mxu0 %v971
        %1007 = vmatprep.subr.mxu0 0.0
        %1008 = vmatpush1.msra.mxu0 %v972
        %1009 = vmatprep.subr.mxu0 0.0
        %1010 = vmatpush1.msra.mxu0 %v973
        %1011 = vmatprep.subr.mxu0 0.0
        %1012 = vmatpush1.msra.mxu0 %v974
        %1013 = vmatprep.subr.mxu0 0.0
        %1014 = vmatpush1.msra.mxu0 %v975
        %1015 = vmatprep.subr.mxu0 0.0
        %1016 = vmatpush1.msra.mxu0 0.0
        %1017 = vmatprep.subr.mxu0 0.0
        %1018 = vmatpush1.msra.mxu0 0.0
        %1019 = vmatprep.subr.mxu0 0.0
        %1020 = vmatpush1.msra.mxu0 0.0
        %1021 = vmatprep.subr.mxu0 0.0
        %1022 = vmatpush1.msra.mxu0 0.0
        %1023 = vmatprep.subr.mxu0 0.0
        %1024 = vmatpush1.msra.mxu0 0.0
        %1025 = vmatprep.subr.mxu0 0.0
        %1026 = vmatpush1.msra.mxu0 0.0
        %1027 = vmatprep.subr.mxu0 0.0
        %1028 = vmatpush1.msra.mxu0 0.0
        %1029 = vmatprep.subr.mxu0 0.0
        %1030 = vmatpush1.msra.mxu0 0.0
        %1031 = vmatprep.subr.mxu0 0.0
        %1032 = vmatpush1.msra.mxu0 0.0
        %1033 = vmatprep.subr.mxu0 0.0
        %1034 = vmatpush1.msra.mxu0 0.0
        %1035 = vmatprep.subr.mxu0 0.0
        %1036 = vmatpush1.msra.mxu0 0.0
        %1037 = vmatprep.subr.mxu0 0.0
        %1038 = vmatpush1.msra.mxu0 0.0
        %1039 = vmatprep.subr.mxu0 0.0
        %1040 = vmatpush1.msra.mxu0 0.0
        %1041 = vmatprep.subr.mxu0 0.0
        %1042 = vmatpush1.msra.mxu0 0.0
        %1043 = vmatprep.subr.mxu0 0.0
        %1044 = vmatpush1.msra.mxu0 0.0
        %1045 = vmatprep.subr.mxu0 0.0
        %1046 = vmatpush1.msra.mxu0 0.0
        %1047 = vmatprep.mubr.f32.mxu0 0.0
        %1048 = vmatmul.mubr.f32.gmra.mrb[0].mxu0 %v959
        %v1049 = vpop.f32.mrb[0].mxu0
        %v1050 = vadd.f32 %v981, %v1049
        %v1051 = vpop.f32.mrb[0].mxu0
        %1052 = vdwg.mxu0
        %v1053 = vxor.u32 %v1050, 2147483648
        %v1054 = vmul.f32 %v1053, 1.442695
        %v1055 = vpow.pop %v1054
        %v1056 = vadd.f32 %v1055, 1.0
        %v1057 = vrcp.pop %v1056
        %v1058 = vmul.f32 1.0, %v1057
        %v1059 = vtanh.pop %v1050
        %1061 = vrot.lane.b32.xlu0 %v702, 32
        %v1062 = vpop.permute.xlu0 %1061
        %v1064 = vmul.f32 %v1058, %v1062
        %1066 = vrot.lane.b32.xlu0 %v1059, 64
        %v1067 = vpop.permute.xlu0 %1066
        %v1069 = vmul.f32 %v1058, %v1067
        %1071 = vrot.lane.b32.xlu0 %v1069, 32
        %v1072 = vpop.permute.xlu0 %1071
        %v1074 = vadd.f32 %v1064, %v1072
        %v1075 = vtanh.pop %v1074
        %1077 = vrot.lane.b32.xlu0 %v1075, 64
        %v1078 = vpop.permute.xlu0 %1077
        %v1080 = vmul.f32 %v1058, %v1078
        %v1081 = vld [vmem:[%s11] sm:$0xff]
        %v1082 = vld [vmem:[%s11 + $0x8] sm:$0xff]
        %v1083 = vld [vmem:[%s11 + $0x10] sm:$0xff]
        %v1084 = vld [vmem:[%s11 + $0x18] sm:$0xff]
        %v1085 = vld [vmem:[%s12] sm:$0x1]
        %v1087 = vlaneseq
        %v1088 = vshrl.u32 %v1087, 7
        %v1089 = vsub.s32 0, %v1088
        %v1090 = vrot.slane %v1085, %v1089
        %1093 = vrot.lane.b32.xlu0 %v1080, 32
        %v1094 = vpop.permute.xlu0 %1093
        %v1095 = vsel %vm712, %v1094, 0
        %1097 = vmatprep.subr.mxu0 0.0
        %1098 = vmatpush1.msra.mxu0 %v1081
        %1099 = vmatprep.subr.mxu0 0.0
        %1100 = vmatpush1.msra.mxu0 %v1082
        %1101 = vmatprep.subr.mxu0 0.0
        %1102 = vmatpush1.msra.mxu0 %v1083
        %1103 = vmatprep.subr.mxu0 0.0
        %1104 = vmatpush1.msra.mxu0 %v1084
        %1105 = vmatprep.subr.mxu0 0.0
        %1106 = vmatpush1.msra.mxu0 0.0
        %1107 = vmatprep.subr.mxu0 0.0
        %1108 = vmatpush1.msra.mxu0 0.0
        %1109 = vmatprep.subr.mxu0 0.0
        %1110 = vmatpush1.msra.mxu0 0.0
        %1111 = vmatprep.subr.mxu0 0.0
        %1112 = vmatpush1.msra.mxu0 0.0
        %1113 = vmatprep.subr.mxu0 0.0
        %1114 = vmatpush1.msra.mxu0 0.0
        %1115 = vmatprep.subr.mxu0 0.0
        %1116 = vmatpush1.msra.mxu0 0.0
        %1117 = vmatprep.subr.mxu0 0.0
        %1118 = vmatpush1.msra.mxu0 0.0
        %1119 = vmatprep.subr.mxu0 0.0
        %1120 = vmatpush1.msra.mxu0 0.0
        %1121 = vmatprep.subr.mxu0 0.0
        %1122 = vmatpush1.msra.mxu0 0.0
        %1123 = vmatprep.subr.mxu0 0.0
        %1124 = vmatpush1.msra.mxu0 0.0
        %1125 = vmatprep.subr.mxu0 0.0
        %1126 = vmatpush1.msra.mxu0 0.0
        %1127 = vmatprep.subr.mxu0 0.0
        %1128 = vmatpush1.msra.mxu0 0.0
        %1129 = vmatprep.subr.mxu0 0.0
        %1130 = vmatpush1.msra.mxu0 0.0
        %1131 = vmatprep.subr.mxu0 0.0
        %1132 = vmatpush1.msra.mxu0 0.0
        %1133 = vmatprep.subr.mxu0 0.0
        %1134 = vmatpush1.msra.mxu0 0.0
        %1135 = vmatprep.subr.mxu0 0.0
        %1136 = vmatpush1.msra.mxu0 0.0
        %1137 = vmatprep.subr.mxu0 0.0
        %1138 = vmatpush1.msra.mxu0 0.0
        %1139 = vmatprep.subr.mxu0 0.0
        %1140 = vmatpush1.msra.mxu0 0.0
        %1141 = vmatprep.subr.mxu0 0.0
        %1142 = vmatpush1.msra.mxu0 0.0
        %1143 = vmatprep.subr.mxu0 0.0
        %1144 = vmatpush1.msra.mxu0 0.0
        %1145 = vmatprep.subr.mxu0 0.0
        %1146 = vmatpush1.msra.mxu0 0.0
        %1147 = vmatprep.subr.mxu0 0.0
        %1148 = vmatpush1.msra.mxu0 0.0
        %1149 = vmatprep.subr.mxu0 0.0
        %1150 = vmatpush1.msra.mxu0 0.0
        %1151 = vmatprep.subr.mxu0 0.0
        %1152 = vmatpush1.msra.mxu0 0.0
        %1153 = vmatprep.subr.mxu0 0.0
        %1154 = vmatpush1.msra.mxu0 0.0
        %1155 = vmatprep.subr.mxu0 0.0
        %1156 = vmatpush1.msra.mxu0 0.0
        %1157 = vmatprep.subr.mxu0 0.0
        %1158 = vmatpush1.msra.mxu0 0.0
        %1159 = vmatprep.subr.mxu0 0.0
        %1160 = vmatpush1.msra.mxu0 0.0
        %1161 = vmatprep.mubr.f32.mxu0 0.0
        %1162 = vmatmul.mubr.f32.gmra.mrb[0].mxu0 %v1095
        %v1163 = vpop.f32.mrb[0].mxu0
        %v1164 = vadd.f32 %v1090, %v1163
        %v1165 = vpop.f32.mrb[0].mxu0
        %1166 = vdwg.mxu0
        %vm1167 = vcmask 189440
        %v1168 = vsel %vm1167, %v1164, -inf
        %1169 = vmax.xlane.f32.xlu0 %v1168
        %v1170 = vpop.xlane.xlu0 %1169
        %v1171 = vsub.f32 %v1164, %v1170
        %v1172 = vmul.f32 %v1171, 1.442695
        %v1173 = vpow.pop %v1172
        %v1174 = vsel %vm1167, %v1173, 0.0
        %1175 = vadd.xlane.f32.xlu0 %v1174
        %v1176 = vpop.xlane.xlu0 %1175
        %v1177 = vlog2.pop %v1176
        %v1178 = vmul.f32 %v1177, 0.6931472
        %v1179 = vsub.f32 %v1171, %v1178
        %1181 = vst.msk [vmem:[#allocation3] sm:$0x3] %vm944, %v1094
        %1183 = vrot.lane.b32.xlu0 %v1074, 96
        %v1184 = vpop.permute.xlu0 %1183
        %1186 = vst.msk [vmem:[#allocation4] sm:$0x3] %vm944, %v1184
        %1187 = vst.msk [vmem:[%s477] sm:$0x3] %vm1167, %v1179
        %1189 = vrot.lane.b32.xlu0 %v897, 24
        %v1190 = vpop.permute.xlu0 %1189
        %vm1192 = vcmask 312512
        %1193 = vst.msk [vmem:[%s477] sm:$0x3] %vm1192, %v1190
        %p1194 = scmp.eq.s32.totalorder %s31, 14
        // Predicated region
        $region77: #{tpu_custom_call.1} parent=71 // pred_check
          %p1195 = pneg %p1194
        $region78: #{tpu_custom_call.1} parent=71 // pred_check_branch
          %1197 = sbr.rel (%p1195) target = $region80
        $region79: #{tpu_custom_call.1} parent=71 // pred_region
          %1198 = vst.msk [vmem:[#allocation8] sm:$0x3] %vm944, %v1094
          %1199 = vst.msk [vmem:[#allocation10] sm:$0x3] %vm944, %v1184
        $region80: #{tpu_custom_call.1} parent=71 // pred_fallthru
          _
        %s1200 = sand.u32 %s317, 1
        %s1201 = scalar_lea.sflag [#allocation7], %s1200
        %s1202 = sand.u32 %s317, 1
        %s1203 = smul.addr %s1202, 2
        %s1204 = scalar_lea.vmem [#allocation6], %s1203
        // Predicated region
        $region81: #{tpu_custom_call.1} parent=71 // pred_check
          %p1205 = pneg %p327
        $region82: #{tpu_custom_call.1} parent=71 // pred_check_branch
          %1207 = sbr.rel (%p1205) target = $region84
        $region83: #{tpu_custom_call.1} parent=71 // pred_region
          %s1209 = ssub.s32 32, 32
          %1210 = vsyncadd %s1201, %s1209
          %s1211 = smul.addr %s31, 32
          %s1212 = scalar_lea.hbm %s13, %s1211
          %s1214 = sshll.u32 %s1204, 4
          %s1215 = int_to_ptr.vmem [resolvable:$true] %s1214
          %1217 = dma.vmem_to_hbm [thread:$0]  %s1215, 32, %s1212, %s1201
        $region84: #{tpu_custom_call.1} parent=71 // pred_fallthru
          _
        // Predicated region
        $region85: #{tpu_custom_call.1} parent=71 // pred_check
          %p1218 = pneg %p348
        $region86: #{tpu_custom_call.1} parent=71 // pred_check_branch
          %1220 = sbr.rel (%p1218) target = $region88
        $region87: #{tpu_custom_call.1} parent=71 // pred_region
          %s1222 = ssub.s32 32, 32
          %1223 = vsyncadd [#allocation9], %s1222
          %s1225 = sshll.u32 [#allocation8], 4
          %s1226 = int_to_ptr.vmem [resolvable:$true] %s1225
          %1228 = dma.vmem_to_hbm [thread:$0]  %s1226, 32, %s14, [#allocation9]
        $region88: #{tpu_custom_call.1} parent=71 // pred_fallthru
          _
        // Predicated region
        $region89: #{tpu_custom_call.1} parent=71 // pred_check
          %p1229 = pneg %p369
        $region90: #{tpu_custom_call.1} parent=71 // pred_check_branch
          %1231 = sbr.rel (%p1229) target = $region92
        $region91: #{tpu_custom_call.1} parent=71 // pred_region
          %s1233 = ssub.s32 32, 32
          %1234 = vsyncadd [#allocation9], %s1233
          %s1236 = sshll.u32 [#allocation10], 4
          %s1237 = int_to_ptr.vmem [resolvable:$true] %s1236
          %1239 = dma.vmem_to_hbm [thread:$0]  %s1237, 32, %s15, [#allocation9]
        $region92: #{tpu_custom_call.1} parent=71 // pred_fallthru
          _
        // Predicated region
        $region93: #{tpu_custom_call.1} parent=71 // pred_check
          %p1240 = pneg %p348
        $region94: #{tpu_custom_call.1} parent=71 // pred_check_branch
          %1242 = sbr.rel (%p1240) target = $region96
        $region95: #{tpu_custom_call.1} parent=71 // pred_region
          %1243 = dma.done [#allocation9], 32
        $region96: #{tpu_custom_call.1} parent=71 // pred_fallthru
          _
        // Predicated region
        $region97: #{tpu_custom_call.1} parent=71 // pred_check
          %p1244 = pneg %p369
        $region98: #{tpu_custom_call.1} parent=71 // pred_check_branch
          %1246 = sbr.rel (%p1244) target = $region100
        $region99: #{tpu_custom_call.1} parent=71 // pred_region
          %1247 = dma.done [#allocation9], 32
        $region100: #{tpu_custom_call.1} parent=71 // pred_fallthru
          _
      $region72: #{tpu_custom_call.1} parent=5 // pred_fallthru
        _
      %p1248 = scmp.le.s32.totalorder 2, %s26
      // Predicated region
      $region101: #{tpu_custom_call.1} parent=5 // pred_check
        %p1249 = pneg %p1248
      $region102: #{tpu_custom_call.1} parent=5 // pred_check_branch
        %1251 = sbr.rel (%p1249) target = $region104
      $region103: #{tpu_custom_call.1} parent=5 // pred_region
        %s1252 = ssub.s32 %s26, 2
        // Predicated region
        $region105: #{tpu_custom_call.1} parent=103 // pred_check
          %p1253 = pneg %p333
        $region106: #{tpu_custom_call.1} parent=103 // pred_check_branch
          %1255 = sbr.rel (%p1253) target = $region108
        $region107: #{tpu_custom_call.1} parent=103 // pred_region
          %s1256 = sand.u32 %s318, 1
          %s1257 = scalar_lea.sflag [#allocation7], %s1256
          %s1258 = sand.u32 %s318, 1
          %s1259 = smul.addr %s1258, 2
          %s1260 = scalar_lea.vmem [#allocation6], %s1259
          %1261 = dma.done %s1257, 32
        $region108: #{tpu_custom_call.1} parent=103 // pred_fallthru
          _
      $region104: #{tpu_custom_call.1} parent=5 // pred_fallthru
        _
    $region6: #{tpu_custom_call.1} parent=1 // loop_footer
      %s30 = sadd.s32 1, %s26
    $region7: #{tpu_custom_call.1} parent=1 // loop_footer_branch
      %25 = sbr.rel target = $region3
    $region8: #{tpu_custom_call.1} parent=1 // loop_exit
      _
    %1262 = vsyncpa [#allocation7], 1
    %s1263 = scalar_lea.sflag [#allocation7], 1
    %1264 = vsyncpa %s1263, 1
    %1265 = vsyncpa [#allocation9], 1

</llo_original>
